<compile_context>
chip_gen: v6e
topology: v6e:2x2x1
jax: 0.10.0
libtpu: 0.0.40
codegen_flags: <defaults>
</compile_context>

<pallas_src>
from functools import partial

import jax
import jax.numpy as jnp
from jax.experimental import pallas as pl
from jax.experimental.pallas import tpu as pltpu


def mhsa_kernel(emb_ref, wq_ref, bq_ref, wk_ref, bk_ref, wv_ref, bv_ref,
                wo_ref, bo_ref, wc_ref, bc_ref, out_ref, *, n_heads, head_dim):
    Bt, S, E = emb_ref.shape
    x = emb_ref[...].reshape(Bt * S, E)                       # bf16 (Bt*S, E)

    # Q/K/V projections: single large bf16 MXU matmuls, f32 accumulation.
    Q = jnp.dot(x, wq_ref[...], preferred_element_type=jnp.float32) + bq_ref[...]
    K = jnp.dot(x, wk_ref[...], preferred_element_type=jnp.float32) + bk_ref[...]
    V = jnp.dot(x, wv_ref[...], preferred_element_type=jnp.float32) + bv_ref[...]

    Q3 = Q.reshape(Bt, S, E)
    K3 = K.reshape(Bt, S, E)
    V3 = V.reshape(Bt, S, E)

    inv_sqrt_d = 1.0 / (head_dim ** 0.5)

    # Per-head attention, batched over the batch block (heads are a tiny,
    # fully-unrolled static loop).  Matches view(B,S,H,k).transpose(1,2).
    head_outs = []
    for h in range(n_heads):
        lo, hi = h * head_dim, (h + 1) * head_dim
        Qh = Q3[:, :, lo:hi].astype(jnp.bfloat16)             # (Bt, S, d)
        Kh = K3[:, :, lo:hi].astype(jnp.bfloat16)
        Vh = V3[:, :, lo:hi].astype(jnp.bfloat16)

        # Contract last dims directly (no Kh.T), batched over Bt.
        s = jnp.einsum('bqd,bkd->bqk', Qh, Kh,
                       preferred_element_type=jnp.float32) * inv_sqrt_d
        m = jnp.max(s, axis=-1, keepdims=True)
        e = jnp.exp(s - m)
        denom = jnp.sum(e, axis=-1, keepdims=True)
        p = e * pl.reciprocal(denom, approx=True)             # softmax(dim=-1)
        head_outs.append(
            jnp.einsum('bqk,bkd->bqd', p.astype(jnp.bfloat16), Vh,
                       preferred_element_type=jnp.float32))   # (Bt, S, d)

    attn = jnp.concatenate(head_outs, axis=-1)                # (Bt, S, E) f32
    attn2 = attn.reshape(Bt * S, E).astype(jnp.bfloat16)

    # Output projection (one big matmul over all Bt*S rows).
    proj = jnp.dot(attn2, wo_ref[...],
                   preferred_element_type=jnp.float32) + bo_ref[...]   # (Bt*S, E)

    # Max-pool over the sequence axis (torch.max(..., dim=1)[0]).
    pooled = jnp.max(proj.reshape(Bt, S, E), axis=1)          # (Bt, E)

    # Classifier; lane-dense (Bt, out_dim) store.
    out_ref[...] = (jnp.dot(pooled.astype(jnp.bfloat16), wc_ref[...],
                            preferred_element_type=jnp.float32) + bc_ref[...])


def _pick_block_b(B, S, target_rows=256):
    """Batch block so each grid step feeds ~target_rows rows to the MXU."""
    target = max(1, target_rows // max(S, 1))
    if B <= target:
        return B                                   # whole batch in one step
    # Otherwise block must divide B and keep the (block_b, out_dim) output
    # block sublane-aligned (multiple of 8) to satisfy the (8,128) rule.
    for bb in range(min(B, target), 0, -1):
        if B % bb == 0 and bb % 8 == 0:
            return bb
    return B


def mhsa_forward(x_ids, params, n_heads):
    # Embedding gather (glue, plain JAX); cast activations to bf16 for the MXU.
    emb = params["embedding"][x_ids].astype(jnp.bfloat16)     # (B, S, E)
    B, S, E = emb.shape
    head_dim = E // n_heads
    out_dim = params["wc"].shape[-1]

    block_b = _pick_block_b(B, S)
    grid = (B // block_b,)

    def whole(shape):
        return pl.BlockSpec(shape, lambda b: (0,) * len(shape))

    kernel = partial(mhsa_kernel, n_heads=n_heads, head_dim=head_dim)

    return pl.pallas_call(
        kernel,
        out_shape=jax.ShapeDtypeStruct((B, out_dim), jnp.float32),
        grid=grid,
        in_specs=[
            pl.BlockSpec((block_b, S, E), lambda b: (b, 0, 0)),  # embeddings block
            whole((E, E)), whole((1, E)),                        # W_q, b_q
            whole((E, E)), whole((1, E)),                        # W_k, b_k
            whole((E, E)), whole((1, E)),                        # W_v, b_v
            whole((E, E)), whole((1, E)),                        # output_proj
            whole((E, out_dim)), whole((1, out_dim)),            # classifier
        ],
        out_specs=pl.BlockSpec((block_b, out_dim), lambda b: (b, 0)),
        compiler_params=pltpu.CompilerParams(dimension_semantics=("parallel",)),
    )(emb,
      params["wq"], params["bq"], params["wk"], params["bk"],
      params["wv"], params["bv"], params["wo"], params["bo"],
      params["wc"], params["bc"])


def init_params(key, vocab_size, emb_size, output_shape, padding_idx=0):
    ks = jax.random.split(key, 11)
    scale = 0.02

    def lin(kw, kb, fan_in, fan_out):
        # stored pre-transposed (in, out); weights in bf16 for the MXU.
        w = (scale * jax.random.normal(kw, (fan_in, fan_out), jnp.float32)
             ).astype(jnp.bfloat16)
        b = scale * jax.random.normal(kb, (1, fan_out), jnp.float32)
        return w, b

    emb_table = scale * jax.random.normal(ks[0], (vocab_size, emb_size), jnp.float32)
    emb_table = emb_table.at[padding_idx].set(0.0)            # nn.Embedding(padding_idx=0)

    wq, bq = lin(ks[1], ks[2], emb_size, emb_size)
    wk, bk = lin(ks[3], ks[4], emb_size, emb_size)
    wv, bv = lin(ks[5], ks[6], emb_size, emb_size)
    wo, bo = lin(ks[7], ks[8], emb_size, emb_size)
    wc, bc = lin(ks[9], ks[10], emb_size, output_shape)

    return dict(embedding=emb_table, wq=wq, bq=bq, wk=wk, bk=bk,
                wv=wv, bv=bv, wo=wo, bo=bo, wc=wc, bc=bc)


if __name__ == "__main__":
    vocab_size, emb_size, output_shape, n_heads = 16, 32, 8, 4
    batch, seq_len = 2, 8

    key = jax.random.PRNGKey(0)
    k_param, k_ids = jax.random.split(key)
    params = init_params(k_param, vocab_size, emb_size, output_shape)
    x_ids = jax.random.randint(k_ids, (batch, seq_len), 0, vocab_size, dtype=jnp.int32)

    out = mhsa_forward(x_ids, params, n_heads)
    jax.block_until_ready(out)
    assert out.shape == (batch, output_shape)
    assert bool(jnp.all(jnp.isfinite(out)))
    print("KERNEL_OK")
</pallas_src>

<mosaic_0001>
module attributes {stable_mosaic.version = 11 : i64} {
  func.func @mhsa_kernel(%arg0: i32, %arg1: memref<2x8x32xbf16, #tpu.memory_space<vmem>>, %arg2: memref<32x32xbf16, #tpu.memory_space<vmem>>, %arg3: memref<1x32xf32, #tpu.memory_space<vmem>>, %arg4: memref<32x32xbf16, #tpu.memory_space<vmem>>, %arg5: memref<1x32xf32, #tpu.memory_space<vmem>>, %arg6: memref<32x32xbf16, #tpu.memory_space<vmem>>, %arg7: memref<1x32xf32, #tpu.memory_space<vmem>>, %arg8: memref<32x32xbf16, #tpu.memory_space<vmem>>, %arg9: memref<1x32xf32, #tpu.memory_space<vmem>>, %arg10: memref<32x8xbf16, #tpu.memory_space<vmem>>, %arg11: memref<1x8xf32, #tpu.memory_space<vmem>>, %arg12: memref<2x8xf32, #tpu.memory_space<vmem>>) attributes {dimension_semantics = [#tpu.dimension_semantics<parallel>], iteration_bounds = array<i64: 1>, scalar_prefetch = 0 : i64, scratch_operands = 0 : i64, tpu.core_type = #tpu.core_type<tc>, window_params = [{transform_indices = @transform_0, window_bounds = array<i64: 2, 8, 32>}, {pipeline_mode = #tpu.pipeline_mode<synchronous>, transform_indices = @transform_1, window_bounds = array<i64: 32, 32>}, {pipeline_mode = #tpu.pipeline_mode<synchronous>, transform_indices = @transform_2, window_bounds = array<i64: 1, 32>}, {pipeline_mode = #tpu.pipeline_mode<synchronous>, transform_indices = @transform_3, window_bounds = array<i64: 32, 32>}, {pipeline_mode = #tpu.pipeline_mode<synchronous>, transform_indices = @transform_4, window_bounds = array<i64: 1, 32>}, {pipeline_mode = #tpu.pipeline_mode<synchronous>, transform_indices = @transform_5, window_bounds = array<i64: 32, 32>}, {pipeline_mode = #tpu.pipeline_mode<synchronous>, transform_indices = @transform_6, window_bounds = array<i64: 1, 32>}, {pipeline_mode = #tpu.pipeline_mode<synchronous>, transform_indices = @transform_7, window_bounds = array<i64: 32, 32>}, {pipeline_mode = #tpu.pipeline_mode<synchronous>, transform_indices = @transform_8, window_bounds = array<i64: 1, 32>}, {pipeline_mode = #tpu.pipeline_mode<synchronous>, transform_indices = @transform_9, window_bounds = array<i64: 32, 8>}, {pipeline_mode = #tpu.pipeline_mode<synchronous>, transform_indices = @transform_10, window_bounds = array<i64: 1, 8>}, {transform_indices = @transform_11, window_bounds = array<i64: 2, 8>}]} {
    %c0 = arith.constant 0 : index
    %c0_0 = arith.constant 0 : index
    %c0_1 = arith.constant 0 : index
    %0 = vector.load %arg1[%c0, %c0_0, %c0_1] : memref<2x8x32xbf16, #tpu.memory_space<vmem>>, vector<2x8x32xbf16>
    %1 = vector.shape_cast %0 : vector<2x8x32xbf16> to vector<16x32xbf16>
    %c0_2 = arith.constant 0 : index
    %c0_3 = arith.constant 0 : index
    %2 = vector.load %arg2[%c0_2, %c0_3] : memref<32x32xbf16, #tpu.memory_space<vmem>>, vector<32x32xbf16>
    %cst = arith.constant dense<0.000000e+00> : vector<16x32xf32>
    %3 = tpu.matmul %1, %2, %cst {dimension_numbers = #tpu.dot_dimension_numbers<[1], [0], [0], [1], [0, 0, 1, 1], [], []>} : vector<16x32xbf16>, vector<32x32xbf16>, vector<16x32xf32> -> vector<16x32xf32>
    %c0_4 = arith.constant 0 : index
    %c0_5 = arith.constant 0 : index
    %4 = vector.load %arg3[%c0_4, %c0_5] : memref<1x32xf32, #tpu.memory_space<vmem>>, vector<1x32xf32>
    %5 = vector.broadcast %4 : vector<1x32xf32> to vector<16x32xf32>
    %6 = arith.addf %3, %5 : vector<16x32xf32>
    %c0_6 = arith.constant 0 : index
    %c0_7 = arith.constant 0 : index
    %7 = vector.load %arg4[%c0_6, %c0_7] : memref<32x32xbf16, #tpu.memory_space<vmem>>, vector<32x32xbf16>
    %cst_8 = arith.constant dense<0.000000e+00> : vector<16x32xf32>
    %8 = tpu.matmul %1, %7, %cst_8 {dimension_numbers = #tpu.dot_dimension_numbers<[1], [0], [0], [1], [0, 0, 1, 1], [], []>} : vector<16x32xbf16>, vector<32x32xbf16>, vector<16x32xf32> -> vector<16x32xf32>
    %c0_9 = arith.constant 0 : index
    %c0_10 = arith.constant 0 : index
    %9 = vector.load %arg5[%c0_9, %c0_10] : memref<1x32xf32, #tpu.memory_space<vmem>>, vector<1x32xf32>
    %10 = vector.broadcast %9 : vector<1x32xf32> to vector<16x32xf32>
    %11 = arith.addf %8, %10 : vector<16x32xf32>
    %c0_11 = arith.constant 0 : index
    %c0_12 = arith.constant 0 : index
    %12 = vector.load %arg6[%c0_11, %c0_12] : memref<32x32xbf16, #tpu.memory_space<vmem>>, vector<32x32xbf16>
    %cst_13 = arith.constant dense<0.000000e+00> : vector<16x32xf32>
    %13 = tpu.matmul %1, %12, %cst_13 {dimension_numbers = #tpu.dot_dimension_numbers<[1], [0], [0], [1], [0, 0, 1, 1], [], []>} : vector<16x32xbf16>, vector<32x32xbf16>, vector<16x32xf32> -> vector<16x32xf32>
    %c0_14 = arith.constant 0 : index
    %c0_15 = arith.constant 0 : index
    %14 = vector.load %arg7[%c0_14, %c0_15] : memref<1x32xf32, #tpu.memory_space<vmem>>, vector<1x32xf32>
    %15 = vector.broadcast %14 : vector<1x32xf32> to vector<16x32xf32>
    %16 = arith.addf %13, %15 : vector<16x32xf32>
    %17 = vector.shape_cast %6 : vector<16x32xf32> to vector<2x8x32xf32>
    %18 = vector.shape_cast %11 : vector<16x32xf32> to vector<2x8x32xf32>
    %19 = vector.shape_cast %16 : vector<16x32xf32> to vector<2x8x32xf32>
    %20 = vector.extract_strided_slice %17 {offsets = [0, 0, 0], sizes = [2, 8, 8], strides = [1, 1, 1]} : vector<2x8x32xf32> to vector<2x8x8xf32>
    %21 = arith.truncf %20 : vector<2x8x8xf32> to vector<2x8x8xbf16>
    %22 = vector.extract_strided_slice %18 {offsets = [0, 0, 0], sizes = [2, 8, 8], strides = [1, 1, 1]} : vector<2x8x32xf32> to vector<2x8x8xf32>
    %23 = arith.truncf %22 : vector<2x8x8xf32> to vector<2x8x8xbf16>
    %24 = vector.extract_strided_slice %19 {offsets = [0, 0, 0], sizes = [2, 8, 8], strides = [1, 1, 1]} : vector<2x8x32xf32> to vector<2x8x8xf32>
    %25 = arith.truncf %24 : vector<2x8x8xf32> to vector<2x8x8xbf16>
    "tpu.trace_start"() <{level = 10 : i32, message = "bqd,bkd->bqk"}> : () -> ()
    %cst_16 = arith.constant dense<0.000000e+00> : vector<2x8x8xf32>
    %26 = tpu.matmul %21, %23, %cst_16 {dimension_numbers = #tpu.dot_dimension_numbers<[2], [2], [1], [1], [0, 0, 0, 1, 1, 1], [0], [0]>} : vector<2x8x8xbf16>, vector<2x8x8xbf16>, vector<2x8x8xf32> -> vector<2x8x8xf32>
    "tpu.trace_stop"() : () -> ()
    %cst_17 = arith.constant 0.353553385 : f32
    %27 = vector.broadcast %cst_17 : f32 to vector<2x8x8xf32>
    %28 = arith.mulf %26, %27 : vector<2x8x8xf32>
    %cst_18 = arith.constant dense<0xFF800000> : vector<2x8xf32>
    %29 = vector.multi_reduction <maximumf>, %28, %cst_18 [2] : vector<2x8x8xf32> to vector<2x8xf32>
    %30 = vector.shape_cast %29 : vector<2x8xf32> to vector<2x8x1xf32>
    %31 = vector.broadcast %30 : vector<2x8x1xf32> to vector<2x8x8xf32>
    %32 = arith.subf %28, %31 : vector<2x8x8xf32>
    %33 = math.exp %32 : vector<2x8x8xf32>
    %cst_19 = arith.constant dense<0.000000e+00> : vector<2x8xf32>
    %34 = vector.multi_reduction <add>, %33, %cst_19 [2] : vector<2x8x8xf32> to vector<2x8xf32>
    %35 = vector.shape_cast %34 : vector<2x8xf32> to vector<2x8x1xf32>
    %36 = tpu.reciprocal %35 {approx = true} : vector<2x8x1xf32> -> vector<2x8x1xf32>
    %37 = vector.broadcast %36 : vector<2x8x1xf32> to vector<2x8x8xf32>
    %38 = arith.mulf %33, %37 : vector<2x8x8xf32>
    %39 = arith.truncf %38 : vector<2x8x8xf32> to vector<2x8x8xbf16>
    "tpu.trace_start"() <{level = 10 : i32, message = "bqk,bkd->bqd"}> : () -> ()
    %cst_20 = arith.constant dense<0.000000e+00> : vector<2x8x8xf32>
    %40 = tpu.matmul %39, %25, %cst_20 {dimension_numbers = #tpu.dot_dimension_numbers<[2], [1], [1], [2], [0, 0, 0, 1, 1, 2], [0], [0]>} : vector<2x8x8xbf16>, vector<2x8x8xbf16>, vector<2x8x8xf32> -> vector<2x8x8xf32>
    "tpu.trace_stop"() : () -> ()
    %41 = vector.extract_strided_slice %17 {offsets = [0, 0, 8], sizes = [2, 8, 8], strides = [1, 1, 1]} : vector<2x8x32xf32> to vector<2x8x8xf32>
    %42 = arith.truncf %41 : vector<2x8x8xf32> to vector<2x8x8xbf16>
    %43 = vector.extract_strided_slice %18 {offsets = [0, 0, 8], sizes = [2, 8, 8], strides = [1, 1, 1]} : vector<2x8x32xf32> to vector<2x8x8xf32>
    %44 = arith.truncf %43 : vector<2x8x8xf32> to vector<2x8x8xbf16>
    %45 = vector.extract_strided_slice %19 {offsets = [0, 0, 8], sizes = [2, 8, 8], strides = [1, 1, 1]} : vector<2x8x32xf32> to vector<2x8x8xf32>
    %46 = arith.truncf %45 : vector<2x8x8xf32> to vector<2x8x8xbf16>
    "tpu.trace_start"() <{level = 10 : i32, message = "bqd,bkd->bqk"}> : () -> ()
    %cst_21 = arith.constant dense<0.000000e+00> : vector<2x8x8xf32>
    %47 = tpu.matmul %42, %44, %cst_21 {dimension_numbers = #tpu.dot_dimension_numbers<[2], [2], [1], [1], [0, 0, 0, 1, 1, 1], [0], [0]>} : vector<2x8x8xbf16>, vector<2x8x8xbf16>, vector<2x8x8xf32> -> vector<2x8x8xf32>
    "tpu.trace_stop"() : () -> ()
    %cst_22 = arith.constant 0.353553385 : f32
    %48 = vector.broadcast %cst_22 : f32 to vector<2x8x8xf32>
    %49 = arith.mulf %47, %48 : vector<2x8x8xf32>
    %cst_23 = arith.constant dense<0xFF800000> : vector<2x8xf32>
    %50 = vector.multi_reduction <maximumf>, %49, %cst_23 [2] : vector<2x8x8xf32> to vector<2x8xf32>
    %51 = vector.shape_cast %50 : vector<2x8xf32> to vector<2x8x1xf32>
    %52 = vector.broadcast %51 : vector<2x8x1xf32> to vector<2x8x8xf32>
    %53 = arith.subf %49, %52 : vector<2x8x8xf32>
    %54 = math.exp %53 : vector<2x8x8xf32>
    %cst_24 = arith.constant dense<0.000000e+00> : vector<2x8xf32>
    %55 = vector.multi_reduction <add>, %54, %cst_24 [2] : vector<2x8x8xf32> to vector<2x8xf32>
    %56 = vector.shape_cast %55 : vector<2x8xf32> to vector<2x8x1xf32>
    %57 = tpu.reciprocal %56 {approx = true} : vector<2x8x1xf32> -> vector<2x8x1xf32>
    %58 = vector.broadcast %57 : vector<2x8x1xf32> to vector<2x8x8xf32>
    %59 = arith.mulf %54, %58 : vector<2x8x8xf32>
    %60 = arith.truncf %59 : vector<2x8x8xf32> to vector<2x8x8xbf16>
    "tpu.trace_start"() <{level = 10 : i32, message = "bqk,bkd->bqd"}> : () -> ()
    %cst_25 = arith.constant dense<0.000000e+00> : vector<2x8x8xf32>
    %61 = tpu.matmul %60, %46, %cst_25 {dimension_numbers = #tpu.dot_dimension_numbers<[2], [1], [1], [2], [0, 0, 0, 1, 1, 2], [0], [0]>} : vector<2x8x8xbf16>, vector<2x8x8xbf16>, vector<2x8x8xf32> -> vector<2x8x8xf32>
    "tpu.trace_stop"() : () -> ()
    %62 = vector.extract_strided_slice %17 {offsets = [0, 0, 16], sizes = [2, 8, 8], strides = [1, 1, 1]} : vector<2x8x32xf32> to vector<2x8x8xf32>
    %63 = arith.truncf %62 : vector<2x8x8xf32> to vector<2x8x8xbf16>
    %64 = vector.extract_strided_slice %18 {offsets = [0, 0, 16], sizes = [2, 8, 8], strides = [1, 1, 1]} : vector<2x8x32xf32> to vector<2x8x8xf32>
    %65 = arith.truncf %64 : vector<2x8x8xf32> to vector<2x8x8xbf16>
    %66 = vector.extract_strided_slice %19 {offsets = [0, 0, 16], sizes = [2, 8, 8], strides = [1, 1, 1]} : vector<2x8x32xf32> to vector<2x8x8xf32>
    %67 = arith.truncf %66 : vector<2x8x8xf32> to vector<2x8x8xbf16>
    "tpu.trace_start"() <{level = 10 : i32, message = "bqd,bkd->bqk"}> : () -> ()
    %cst_26 = arith.constant dense<0.000000e+00> : vector<2x8x8xf32>
    %68 = tpu.matmul %63, %65, %cst_26 {dimension_numbers = #tpu.dot_dimension_numbers<[2], [2], [1], [1], [0, 0, 0, 1, 1, 1], [0], [0]>} : vector<2x8x8xbf16>, vector<2x8x8xbf16>, vector<2x8x8xf32> -> vector<2x8x8xf32>
    "tpu.trace_stop"() : () -> ()
    %cst_27 = arith.constant 0.353553385 : f32
    %69 = vector.broadcast %cst_27 : f32 to vector<2x8x8xf32>
    %70 = arith.mulf %68, %69 : vector<2x8x8xf32>
    %cst_28 = arith.constant dense<0xFF800000> : vector<2x8xf32>
    %71 = vector.multi_reduction <maximumf>, %70, %cst_28 [2] : vector<2x8x8xf32> to vector<2x8xf32>
    %72 = vector.shape_cast %71 : vector<2x8xf32> to vector<2x8x1xf32>
    %73 = vector.broadcast %72 : vector<2x8x1xf32> to vector<2x8x8xf32>
    %74 = arith.subf %70, %73 : vector<2x8x8xf32>
    %75 = math.exp %74 : vector<2x8x8xf32>
    %cst_29 = arith.constant dense<0.000000e+00> : vector<2x8xf32>
    %76 = vector.multi_reduction <add>, %75, %cst_29 [2] : vector<2x8x8xf32> to vector<2x8xf32>
    %77 = vector.shape_cast %76 : vector<2x8xf32> to vector<2x8x1xf32>
    %78 = tpu.reciprocal %77 {approx = true} : vector<2x8x1xf32> -> vector<2x8x1xf32>
    %79 = vector.broadcast %78 : vector<2x8x1xf32> to vector<2x8x8xf32>
    %80 = arith.mulf %75, %79 : vector<2x8x8xf32>
    %81 = arith.truncf %80 : vector<2x8x8xf32> to vector<2x8x8xbf16>
    "tpu.trace_start"() <{level = 10 : i32, message = "bqk,bkd->bqd"}> : () -> ()
    %cst_30 = arith.constant dense<0.000000e+00> : vector<2x8x8xf32>
    %82 = tpu.matmul %81, %67, %cst_30 {dimension_numbers = #tpu.dot_dimension_numbers<[2], [1], [1], [2], [0, 0, 0, 1, 1, 2], [0], [0]>} : vector<2x8x8xbf16>, vector<2x8x8xbf16>, vector<2x8x8xf32> -> vector<2x8x8xf32>
    "tpu.trace_stop"() : () -> ()
    %83 = vector.extract_strided_slice %17 {offsets = [0, 0, 24], sizes = [2, 8, 8], strides = [1, 1, 1]} : vector<2x8x32xf32> to vector<2x8x8xf32>
    %84 = arith.truncf %83 : vector<2x8x8xf32> to vector<2x8x8xbf16>
    %85 = vector.extract_strided_slice %18 {offsets = [0, 0, 24], sizes = [2, 8, 8], strides = [1, 1, 1]} : vector<2x8x32xf32> to vector<2x8x8xf32>
    %86 = arith.truncf %85 : vector<2x8x8xf32> to vector<2x8x8xbf16>
    %87 = vector.extract_strided_slice %19 {offsets = [0, 0, 24], sizes = [2, 8, 8], strides = [1, 1, 1]} : vector<2x8x32xf32> to vector<2x8x8xf32>
    %88 = arith.truncf %87 : vector<2x8x8xf32> to vector<2x8x8xbf16>
    "tpu.trace_start"() <{level = 10 : i32, message = "bqd,bkd->bqk"}> : () -> ()
    %cst_31 = arith.constant dense<0.000000e+00> : vector<2x8x8xf32>
    %89 = tpu.matmul %84, %86, %cst_31 {dimension_numbers = #tpu.dot_dimension_numbers<[2], [2], [1], [1], [0, 0, 0, 1, 1, 1], [0], [0]>} : vector<2x8x8xbf16>, vector<2x8x8xbf16>, vector<2x8x8xf32> -> vector<2x8x8xf32>
    "tpu.trace_stop"() : () -> ()
    %cst_32 = arith.constant 0.353553385 : f32
    %90 = vector.broadcast %cst_32 : f32 to vector<2x8x8xf32>
    %91 = arith.mulf %89, %90 : vector<2x8x8xf32>
    %cst_33 = arith.constant dense<0xFF800000> : vector<2x8xf32>
    %92 = vector.multi_reduction <maximumf>, %91, %cst_33 [2] : vector<2x8x8xf32> to vector<2x8xf32>
    %93 = vector.shape_cast %92 : vector<2x8xf32> to vector<2x8x1xf32>
    %94 = vector.broadcast %93 : vector<2x8x1xf32> to vector<2x8x8xf32>
    %95 = arith.subf %91, %94 : vector<2x8x8xf32>
    %96 = math.exp %95 : vector<2x8x8xf32>
    %cst_34 = arith.constant dense<0.000000e+00> : vector<2x8xf32>
    %97 = vector.multi_reduction <add>, %96, %cst_34 [2] : vector<2x8x8xf32> to vector<2x8xf32>
    %98 = vector.shape_cast %97 : vector<2x8xf32> to vector<2x8x1xf32>
    %99 = tpu.reciprocal %98 {approx = true} : vector<2x8x1xf32> -> vector<2x8x1xf32>
    %100 = vector.broadcast %99 : vector<2x8x1xf32> to vector<2x8x8xf32>
    %101 = arith.mulf %96, %100 : vector<2x8x8xf32>
    %102 = arith.truncf %101 : vector<2x8x8xf32> to vector<2x8x8xbf16>
    "tpu.trace_start"() <{level = 10 : i32, message = "bqk,bkd->bqd"}> : () -> ()
    %cst_35 = arith.constant dense<0.000000e+00> : vector<2x8x8xf32>
    %103 = tpu.matmul %102, %88, %cst_35 {dimension_numbers = #tpu.dot_dimension_numbers<[2], [1], [1], [2], [0, 0, 0, 1, 1, 2], [0], [0]>} : vector<2x8x8xbf16>, vector<2x8x8xbf16>, vector<2x8x8xf32> -> vector<2x8x8xf32>
    "tpu.trace_stop"() : () -> ()
    %104 = tpu.concatenate %40, %61, %82, %103 in 2 : vector<2x8x8xf32>, vector<2x8x8xf32>, vector<2x8x8xf32>, vector<2x8x8xf32> -> vector<2x8x32xf32>
    %105 = vector.shape_cast %104 : vector<2x8x32xf32> to vector<16x32xf32>
    %106 = arith.truncf %105 : vector<16x32xf32> to vector<16x32xbf16>
    %c0_36 = arith.constant 0 : index
    %c0_37 = arith.constant 0 : index
    %107 = vector.load %arg8[%c0_36, %c0_37] : memref<32x32xbf16, #tpu.memory_space<vmem>>, vector<32x32xbf16>
    %cst_38 = arith.constant dense<0.000000e+00> : vector<16x32xf32>
    %108 = tpu.matmul %106, %107, %cst_38 {dimension_numbers = #tpu.dot_dimension_numbers<[1], [0], [0], [1], [0, 0, 1, 1], [], []>} : vector<16x32xbf16>, vector<32x32xbf16>, vector<16x32xf32> -> vector<16x32xf32>
    %c0_39 = arith.constant 0 : index
    %c0_40 = arith.constant 0 : index
    %109 = vector.load %arg9[%c0_39, %c0_40] : memref<1x32xf32, #tpu.memory_space<vmem>>, vector<1x32xf32>
    %110 = vector.broadcast %109 : vector<1x32xf32> to vector<16x32xf32>
    %111 = arith.addf %108, %110 : vector<16x32xf32>
    %112 = vector.shape_cast %111 : vector<16x32xf32> to vector<2x8x32xf32>
    %cst_41 = arith.constant dense<0xFF800000> : vector<2x32xf32>
    %113 = vector.multi_reduction <maximumf>, %112, %cst_41 [1] : vector<2x8x32xf32> to vector<2x32xf32>
    %114 = arith.truncf %113 : vector<2x32xf32> to vector<2x32xbf16>
    %c0_42 = arith.constant 0 : index
    %c0_43 = arith.constant 0 : index
    %115 = vector.load %arg10[%c0_42, %c0_43] : memref<32x8xbf16, #tpu.memory_space<vmem>>, vector<32x8xbf16>
    %cst_44 = arith.constant dense<0.000000e+00> : vector<2x8xf32>
    %116 = tpu.matmul %114, %115, %cst_44 {dimension_numbers = #tpu.dot_dimension_numbers<[1], [0], [0], [1], [0, 0, 1, 1], [], []>} : vector<2x32xbf16>, vector<32x8xbf16>, vector<2x8xf32> -> vector<2x8xf32>
    %c0_45 = arith.constant 0 : index
    %c0_46 = arith.constant 0 : index
    %117 = vector.load %arg11[%c0_45, %c0_46] : memref<1x8xf32, #tpu.memory_space<vmem>>, vector<1x8xf32>
    %118 = vector.broadcast %117 : vector<1x8xf32> to vector<2x8xf32>
    %119 = arith.addf %116, %118 : vector<2x8xf32>
    %c0_47 = arith.constant 0 : index
    %c0_48 = arith.constant 0 : index
    %120 = vector.load %arg12[%c0_47, %c0_48] : memref<2x8xf32, #tpu.memory_space<vmem>>, vector<2x8xf32>
    tpu.vector_store %arg12[%c0_47, %c0_48], %119 {strides = array<i32>} : memref<2x8xf32, #tpu.memory_space<vmem>>, vector<2x8xf32>,
    return
  }
  func.func @transform_0(%arg0: i32) -> (i32, i32, i32) {
    %c0_i32 = arith.constant 0 : i32
    %c0_i32_0 = arith.constant 0 : i32
    %c0_i32_1 = arith.constant 0 : i32
    return %arg0, %c0_i32, %c0_i32_0 : i32, i32, i32
  }
  func.func @transform_1(%arg0: i32) -> (i32, i32) {
    %c0_i32 = arith.constant 0 : i32
    %c0_i32_0 = arith.constant 0 : i32
    %c0_i32_1 = arith.constant 0 : i32
    return %c0_i32, %c0_i32_0 : i32, i32
  }
  func.func @transform_2(%arg0: i32) -> (i32, i32) {
    %c0_i32 = arith.constant 0 : i32
    %c0_i32_0 = arith.constant 0 : i32
    %c0_i32_1 = arith.constant 0 : i32
    return %c0_i32, %c0_i32_0 : i32, i32
  }
  func.func @transform_3(%arg0: i32) -> (i32, i32) {
    %c0_i32 = arith.constant 0 : i32
    %c0_i32_0 = arith.constant 0 : i32
    %c0_i32_1 = arith.constant 0 : i32
    return %c0_i32, %c0_i32_0 : i32, i32
  }
  func.func @transform_4(%arg0: i32) -> (i32, i32) {
    %c0_i32 = arith.constant 0 : i32
    %c0_i32_0 = arith.constant 0 : i32
    %c0_i32_1 = arith.constant 0 : i32
    return %c0_i32, %c0_i32_0 : i32, i32
  }
  func.func @transform_5(%arg0: i32) -> (i32, i32) {
    %c0_i32 = arith.constant 0 : i32
    %c0_i32_0 = arith.constant 0 : i32
    %c0_i32_1 = arith.constant 0 : i32
    return %c0_i32, %c0_i32_0 : i32, i32
  }
  func.func @transform_6(%arg0: i32) -> (i32, i32) {
    %c0_i32 = arith.constant 0 : i32
    %c0_i32_0 = arith.constant 0 : i32
    %c0_i32_1 = arith.constant 0 : i32
    return %c0_i32, %c0_i32_0 : i32, i32
  }
  func.func @transform_7(%arg0: i32) -> (i32, i32) {
    %c0_i32 = arith.constant 0 : i32
    %c0_i32_0 = arith.constant 0 : i32
    %c0_i32_1 = arith.constant 0 : i32
    return %c0_i32, %c0_i32_0 : i32, i32
  }
  func.func @transform_8(%arg0: i32) -> (i32, i32) {
    %c0_i32 = arith.constant 0 : i32
    %c0_i32_0 = arith.constant 0 : i32
    %c0_i32_1 = arith.constant 0 : i32
    return %c0_i32, %c0_i32_0 : i32, i32
  }
  func.func @transform_9(%arg0: i32) -> (i32, i32) {
    %c0_i32 = arith.constant 0 : i32
    %c0_i32_0 = arith.constant 0 : i32
    %c0_i32_1 = arith.constant 0 : i32
    return %c0_i32, %c0_i32_0 : i32, i32
  }
  func.func @transform_10(%arg0: i32) -> (i32, i32) {
    %c0_i32 = arith.constant 0 : i32
    %c0_i32_0 = arith.constant 0 : i32
    %c0_i32_1 = arith.constant 0 : i32
    return %c0_i32, %c0_i32_0 : i32, i32
  }
  func.func @transform_11(%arg0: i32) -> (i32, i32) {
    %c0_i32 = arith.constant 0 : i32
    %c0_i32_0 = arith.constant 0 : i32
    return %arg0, %c0_i32 : i32, i32
  }
}

</mosaic_0001>

<llo_original>
// kernel: tpu_custom_call.1
$region0: #{tpu_custom_call.1}
  #allocation0 [shape = 'u32[]', space=smem, size = 0x4, offset = 0x4, fixed_abs, tag = 'smem constant byte address 0x4 - core index']
  #allocation1 [shape = 'u32[144,128]{1,0:T(1,128)}', space=vmem, size = 0x12000, scoped, tag = 'internal scratch']
  %s0 = inlined_call_operand.hbm [shape: bf16[2,8,32], index: 0, kind: input, shape index: {}]
  %s1 = inlined_call_operand.vmem [shape: bf16[32,32], index: 1, kind: input, shape index: {}]
  %s2 = inlined_call_operand.hbm [shape: f32[1,32], index: 2, kind: input, shape index: {}]
  %s3 = inlined_call_operand.hbm [shape: bf16[32,32], index: 3, kind: input, shape index: {}]
  %s4 = inlined_call_operand.hbm [shape: f32[1,32], index: 4, kind: input, shape index: {}]
  %s5 = inlined_call_operand.hbm [shape: bf16[32,32], index: 5, kind: input, shape index: {}]
  %s6 = inlined_call_operand.hbm [shape: f32[1,32], index: 6, kind: input, shape index: {}]
  %s7 = inlined_call_operand.vmem [shape: bf16[32,32], index: 7, kind: input, shape index: {}]
  %s8 = inlined_call_operand.hbm [shape: f32[1,32], index: 8, kind: input, shape index: {}]
  %s9 = inlined_call_operand.vmem [shape: bf16[32,8], index: 9, kind: input, shape index: {}]
  %s10 = inlined_call_operand.vmem [shape: f32[1,8], index: 10, kind: input, shape index: {}]
  %s11 = inlined_call_operand.hbm [shape: f32[2,8], index: 11, kind: output, shape index: {}]
  %s12 = sld [smem:[#allocation0]]
  $region82: #{tpu_custom_call.1} parent=0
    _
  %s14 = ssub.s32 1, %s12
  %s15 = scalar_select 0, %s14, %s12
  $region1: #{tpu_custom_call.1} parent=0
    #allocation2 [shape = 'u8[4096]{0}', space=vmem, size = 0x1000, scoped, tag = 'input window, operand 0, single buffered']
    #allocation3 [shape = 's32[1]{0}', space=sflag, size = 0x4, scoped, tag = 'scoped memory for tpu_custom_call.1']
    #allocation4 [shape = 's32[1]{0}', space=sflag, size = 0x4, scoped, tag = 'scoped memory for tpu_custom_call.1']
    #allocation5 [shape = 'u8[512]{0}', space=vmem, size = 0x400, scoped, tag = 'input window, operand 2, single buffered']
    #allocation6 [shape = 's32[1]{0}', space=sflag, size = 0x4, scoped, tag = 'scoped memory for tpu_custom_call.1']
    #allocation7 [shape = 'u8[8192]{0}', space=vmem, size = 0x2000, scoped, tag = 'input window, operand 3, single buffered']
    #allocation8 [shape = 'u8[512]{0}', space=vmem, size = 0x400, scoped, tag = 'input window, operand 4, single buffered']
    #allocation9 [shape = 's32[1]{0}', space=sflag, size = 0x4, scoped, tag = 'scoped memory for tpu_custom_call.1']
    #allocation10 [shape = 'u8[8192]{0}', space=vmem, size = 0x2000, scoped, tag = 'input window, operand 5, single buffered']
    #allocation11 [shape = 'u8[512]{0}', space=vmem, size = 0x400, scoped, tag = 'input window, operand 6, single buffered']
    #allocation12 [shape = 's32[1]{0}', space=sflag, size = 0x4, scoped, tag = 'scoped memory for tpu_custom_call.1']
    #allocation13 [shape = 'u8[512]{0}', space=vmem, size = 0x400, scoped, tag = 'input window, operand 8, single buffered']
    #allocation14 [shape = 'u8[1024]{0}', space=vmem, size = 0x400, scoped, tag = 'output window, operand 0, single buffered']
    %16 = vsyncpa [#allocation3], 0
    %17 = vsyncpa [#allocation6], 0
    %18 = vsyncpa [#allocation9], 0
    %19 = vsyncpa [#allocation12], 0
    %20 = vsyncpa [#allocation4], 0
    // Predicated region
    $region2: #{tpu_custom_call.1} parent=1 // pred_check
      _
    $region3: #{tpu_custom_call.1} parent=1 // pred_check_branch
      %22 = sbr.rel (0) target = $region5
    $region4: #{tpu_custom_call.1} parent=1 // pred_region
      %s24 = ssub.s32 128, 128
      %25 = vsyncadd [#allocation3], %s24
      %s26 = sshll.u32 [#allocation2], 4
      %s27 = int_to_ptr.vmem [resolvable:$true] %s26
      %32 = dma.hbm_to_vmem [thread:$0]  %s0, 128, %s27, [#allocation3], 64, 64, 4
    $region5: #{tpu_custom_call.1} parent=1 // pred_fallthru
      _
    // Predicated region
    $region6: #{tpu_custom_call.1} parent=1 // pred_check
      _
    $region7: #{tpu_custom_call.1} parent=1 // pred_check_branch
      %34 = sbr.rel (0) target = $region9
    $region8: #{tpu_custom_call.1} parent=1 // pred_region
      _
    $region9: #{tpu_custom_call.1} parent=1 // pred_fallthru
      _
    // Predicated region
    $region10: #{tpu_custom_call.1} parent=1 // pred_check
      _
    $region11: #{tpu_custom_call.1} parent=1 // pred_check_branch
      %36 = sbr.rel (0) target = $region13
    $region12: #{tpu_custom_call.1} parent=1 // pred_region
      %s38 = ssub.s32 16, 16
      %39 = vsyncadd [#allocation6], %s38
      %s41 = sshll.u32 [#allocation5], 4
      %s42 = int_to_ptr.vmem [resolvable:$true] %s41
      %44 = dma.hbm_to_vmem [thread:$0]  %s2, 16, %s42, [#allocation6]
    $region13: #{tpu_custom_call.1} parent=1 // pred_fallthru
      _
    // Predicated region
    $region14: #{tpu_custom_call.1} parent=1 // pred_check
      _
    $region15: #{tpu_custom_call.1} parent=1 // pred_check_branch
      %46 = sbr.rel (0) target = $region17
    $region16: #{tpu_custom_call.1} parent=1 // pred_region
      %s48 = ssub.s32 256, 256
      %49 = vsyncadd [#allocation6], %s48
      %s50 = sshll.u32 [#allocation7], 4
      %s51 = int_to_ptr.vmem [resolvable:$true] %s50
      %56 = dma.hbm_to_vmem [thread:$0]  %s3, 256, %s51, [#allocation6], 64, 64, 4
    $region17: #{tpu_custom_call.1} parent=1 // pred_fallthru
      _
    // Predicated region
    $region18: #{tpu_custom_call.1} parent=1 // pred_check
      _
    $region19: #{tpu_custom_call.1} parent=1 // pred_check_branch
      %58 = sbr.rel (0) target = $region21
    $region20: #{tpu_custom_call.1} parent=1 // pred_region
      %s60 = ssub.s32 16, 16
      %61 = vsyncadd [#allocation9], %s60
      %s63 = sshll.u32 [#allocation8], 4
      %s64 = int_to_ptr.vmem [resolvable:$true] %s63
      %66 = dma.hbm_to_vmem [thread:$0]  %s4, 16, %s64, [#allocation9]
    $region21: #{tpu_custom_call.1} parent=1 // pred_fallthru
      _
    // Predicated region
    $region22: #{tpu_custom_call.1} parent=1 // pred_check
      _
    $region23: #{tpu_custom_call.1} parent=1 // pred_check_branch
      %68 = sbr.rel (0) target = $region25
    $region24: #{tpu_custom_call.1} parent=1 // pred_region
      %s70 = ssub.s32 256, 256
      %71 = vsyncadd [#allocation9], %s70
      %s72 = sshll.u32 [#allocation10], 4
      %s73 = int_to_ptr.vmem [resolvable:$true] %s72
      %78 = dma.hbm_to_vmem [thread:$0]  %s5, 256, %s73, [#allocation9], 64, 64, 4
    $region25: #{tpu_custom_call.1} parent=1 // pred_fallthru
      _
    // Predicated region
    $region26: #{tpu_custom_call.1} parent=1 // pred_check
      _
    $region27: #{tpu_custom_call.1} parent=1 // pred_check_branch
      %80 = sbr.rel (0) target = $region29
    $region28: #{tpu_custom_call.1} parent=1 // pred_region
      %s82 = ssub.s32 16, 16
      %83 = vsyncadd [#allocation12], %s82
      %s85 = sshll.u32 [#allocation11], 4
      %s86 = int_to_ptr.vmem [resolvable:$true] %s85
      %88 = dma.hbm_to_vmem [thread:$0]  %s6, 16, %s86, [#allocation12]
    $region29: #{tpu_custom_call.1} parent=1 // pred_fallthru
      _
    // Predicated region
    $region30: #{tpu_custom_call.1} parent=1 // pred_check
      _
    $region31: #{tpu_custom_call.1} parent=1 // pred_check_branch
      %90 = sbr.rel (0) target = $region33
    $region32: #{tpu_custom_call.1} parent=1 // pred_region
      _
    $region33: #{tpu_custom_call.1} parent=1 // pred_fallthru
      _
    // Predicated region
    $region34: #{tpu_custom_call.1} parent=1 // pred_check
      _
    $region35: #{tpu_custom_call.1} parent=1 // pred_check_branch
      %92 = sbr.rel (0) target = $region37
    $region36: #{tpu_custom_call.1} parent=1 // pred_region
      %s94 = ssub.s32 16, 16
      %95 = vsyncadd [#allocation12], %s94
      %s97 = sshll.u32 [#allocation13], 4
      %s98 = int_to_ptr.vmem [resolvable:$true] %s97
      %100 = dma.hbm_to_vmem [thread:$0]  %s8, 16, %s98, [#allocation12]
    $region37: #{tpu_custom_call.1} parent=1 // pred_fallthru
      _
    // Predicated region
    $region38: #{tpu_custom_call.1} parent=1 // pred_check
      _
    $region39: #{tpu_custom_call.1} parent=1 // pred_check_branch
      %102 = sbr.rel (0) target = $region41
    $region40: #{tpu_custom_call.1} parent=1 // pred_region
      _
    $region41: #{tpu_custom_call.1} parent=1 // pred_fallthru
      _
    // Predicated region
    $region42: #{tpu_custom_call.1} parent=1 // pred_check
      _
    $region43: #{tpu_custom_call.1} parent=1 // pred_check_branch
      %104 = sbr.rel (0) target = $region45
    $region44: #{tpu_custom_call.1} parent=1 // pred_region
      _
    $region45: #{tpu_custom_call.1} parent=1 // pred_fallthru
      _
    // Predicated region
    $region46: #{tpu_custom_call.1} parent=1 // pred_check
      _
    $region47: #{tpu_custom_call.1} parent=1 // pred_check_branch
      %106 = sbr.rel (0) target = $region49
    $region48: #{tpu_custom_call.1} parent=1 // pred_region
      %107 = dma.done [#allocation3], 128
    $region49: #{tpu_custom_call.1} parent=1 // pred_fallthru
      _
    // Predicated region
    $region50: #{tpu_custom_call.1} parent=1 // pred_check
      _
    $region51: #{tpu_custom_call.1} parent=1 // pred_check_branch
      %109 = sbr.rel (0) target = $region53
    $region52: #{tpu_custom_call.1} parent=1 // pred_region
      %110 = dma.done [#allocation6], 16
    $region53: #{tpu_custom_call.1} parent=1 // pred_fallthru
      _
    // Predicated region
    $region54: #{tpu_custom_call.1} parent=1 // pred_check
      _
    $region55: #{tpu_custom_call.1} parent=1 // pred_check_branch
      %112 = sbr.rel (0) target = $region57
    $region56: #{tpu_custom_call.1} parent=1 // pred_region
      %113 = dma.done [#allocation6], 256
    $region57: #{tpu_custom_call.1} parent=1 // pred_fallthru
      _
    // Predicated region
    $region58: #{tpu_custom_call.1} parent=1 // pred_check
      _
    $region59: #{tpu_custom_call.1} parent=1 // pred_check_branch
      %115 = sbr.rel (0) target = $region61
    $region60: #{tpu_custom_call.1} parent=1 // pred_region
      %116 = dma.done [#allocation9], 16
    $region61: #{tpu_custom_call.1} parent=1 // pred_fallthru
      _
    // Predicated region
    $region62: #{tpu_custom_call.1} parent=1 // pred_check
      _
    $region63: #{tpu_custom_call.1} parent=1 // pred_check_branch
      %118 = sbr.rel (0) target = $region65
    $region64: #{tpu_custom_call.1} parent=1 // pred_region
      %119 = dma.done [#allocation9], 256
    $region65: #{tpu_custom_call.1} parent=1 // pred_fallthru
      _
    // Predicated region
    $region66: #{tpu_custom_call.1} parent=1 // pred_check
      _
    $region67: #{tpu_custom_call.1} parent=1 // pred_check_branch
      %121 = sbr.rel (0) target = $region69
    $region68: #{tpu_custom_call.1} parent=1 // pred_region
      %122 = dma.done [#allocation12], 16
    $region69: #{tpu_custom_call.1} parent=1 // pred_fallthru
      _
    // Predicated region
    $region70: #{tpu_custom_call.1} parent=1 // pred_check
      _
    $region71: #{tpu_custom_call.1} parent=1 // pred_check_branch
      %124 = sbr.rel (0) target = $region73
    $region72: #{tpu_custom_call.1} parent=1 // pred_region
      %125 = dma.done [#allocation12], 16
    $region73: #{tpu_custom_call.1} parent=1 // pred_fallthru
      _
    %v127 = vld [vmem:[#allocation2] sm:$0xf]
    %v128 = vld [vmem:[#allocation2 + $0x4] sm:$0xf]
    %v129 = vld [vmem:[%s1] sm:$0xf]
    %v130 = vld [vmem:[%s1 + $0x4] sm:$0xf]
    %v131 = vld [vmem:[%s1 + $0x8] sm:$0xf]
    %v132 = vld [vmem:[%s1 + $0xc] sm:$0xf]
    %v133 = vld [vmem:[#allocation5] sm:$0x1]
    %v135 = vlaneseq
    %v136 = vshrl.u32 %v135, 7
    %v137 = vsub.s32 0, %v136
    %v138 = vrot.slane %v133, %v137
    %v142 = vunpack.c.l.b16 %v127
    %v143 = vunpack.c.l.b16 %v128
    %v144 = vpack.c.b16 %v143, %v142
    %v149 = vunpack.c.l.b16 %v129
    %v150 = vunpack.c.l.b16 %v130
    %v151 = vunpack.c.l.b16 %v131
    %v152 = vunpack.c.l.b16 %v132
    %v153 = vpack.c.b16 %v150, %v149
    %v154 = vpack.c.b16 %v152, %v151
    %vm157 = vcmask 261120
    %v159 = vsel %vm157, %v144, 0
    %161 = vmatprep.subr.bf16.mxu0 0
    %162 = vmatpush1.bf16.msra.mxu0 0
    %163 = vmatprep.subr.bf16.mxu0 0
    %164 = vmatpush1.bf16.msra.mxu0 0
    %165 = vmatprep.subr.bf16.mxu0 0
    %166 = vmatpush1.bf16.msra.mxu0 0
    %167 = vmatprep.subr.bf16.mxu0 0
    %168 = vmatpush1.bf16.msra.mxu0 0
    %169 = vmatprep.subr.bf16.mxu0 0
    %170 = vmatpush1.bf16.msra.mxu0 0
    %171 = vmatprep.subr.bf16.mxu0 0
    %172 = vmatpush1.bf16.msra.mxu0 0
    %173 = vmatprep.subr.bf16.mxu0 0
    %174 = vmatpush1.bf16.msra.mxu0 %v154
    %175 = vmatprep.subr.bf16.mxu0 0
    %176 = vmatpush1.bf16.msra.mxu0 %v153
    %177 = vmatprep.subr.bf16.mxu0 0
    %178 = vmatpush2.bf16.msra.mxu0 0
    %179 = vmatprep.subr.bf16.mxu0 0
    %180 = vmatpush2.bf16.msra.mxu0 0
    %181 = vmatprep.subr.bf16.mxu0 0
    %182 = vmatpush2.bf16.msra.mxu0 0
    %183 = vmatprep.subr.bf16.mxu0 0
    %184 = vmatpush2.bf16.msra.mxu0 0
    %185 = vmatprep.subr.bf16.mxu0 0
    %186 = vmatpush2.bf16.msra.mxu0 0
    %187 = vmatprep.subr.bf16.mxu0 0
    %188 = vmatpush2.bf16.msra.mxu0 0
    %189 = vmatprep.subr.bf16.mxu0 0
    %190 = vmatpush2.bf16.msra.mxu0 0
    %191 = vmatprep.subr.bf16.mxu0 0
    %192 = vmatpush2.bf16.msra.mxu0 0
    %193 = vmatprep.mubr.bf16.mxu0 0
    %194 = vmatmul.mubr.bf16.gmra.mxu0 %v159
    %v195 = vpop.f32.mrf.mxu0
    %v196 = vadd.f32 %v138, %v195
    %v197 = vpop.f32.mrf.mxu0
    %v198 = vpop.f32.mrf.mxu0
    %v199 = vadd.f32 %v138, %v198
    %v200 = vpop.f32.mrf.mxu0
    %201 = vdwg.mxu0
    %v202 = vld [vmem:[#allocation7] sm:$0xf]
    %v203 = vld [vmem:[#allocation7 + $0x4] sm:$0xf]
    %v204 = vld [vmem:[#allocation7 + $0x8] sm:$0xf]
    %v205 = vld [vmem:[#allocation7 + $0xc] sm:$0xf]
    %v206 = vld [vmem:[#allocation8] sm:$0x1]
    %v208 = vlaneseq
    %v209 = vshrl.u32 %v208, 7
    %v210 = vsub.s32 0, %v209
    %v211 = vrot.slane %v206, %v210
    %v217 = vunpack.c.l.b16 %v202
    %v218 = vunpack.c.l.b16 %v203
    %v219 = vunpack.c.l.b16 %v204
    %v220 = vunpack.c.l.b16 %v205
    %v221 = vpack.c.b16 %v218, %v217
    %v222 = vpack.c.b16 %v220, %v219
    %225 = vmatprep.subr.bf16.mxu0 0
    %226 = vmatpush1.bf16.msra.mxu0 0
    %227 = vmatprep.subr.bf16.mxu0 0
    %228 = vmatpush1.bf16.msra.mxu0 0
    %229 = vmatprep.subr.bf16.mxu0 0
    %230 = vmatpush1.bf16.msra.mxu0 0
    %231 = vmatprep.subr.bf16.mxu0 0
    %232 = vmatpush1.bf16.msra.mxu0 0
    %233 = vmatprep.subr.bf16.mxu0 0
    %234 = vmatpush1.bf16.msra.mxu0 0
    %235 = vmatprep.subr.bf16.mxu0 0
    %236 = vmatpush1.bf16.msra.mxu0 0
    %237 = vmatprep.subr.bf16.mxu0 0
    %238 = vmatpush1.bf16.msra.mxu0 %v222
    %239 = vmatprep.subr.bf16.mxu0 0
    %240 = vmatpush1.bf16.msra.mxu0 %v221
    %241 = vmatprep.subr.bf16.mxu0 0
    %242 = vmatpush2.bf16.msra.mxu0 0
    %243 = vmatprep.subr.bf16.mxu0 0
    %244 = vmatpush2.bf16.msra.mxu0 0
    %245 = vmatprep.subr.bf16.mxu0 0
    %246 = vmatpush2.bf16.msra.mxu0 0
    %247 = vmatprep.subr.bf16.mxu0 0
    %248 = vmatpush2.bf16.msra.mxu0 0
    %249 = vmatprep.subr.bf16.mxu0 0
    %250 = vmatpush2.bf16.msra.mxu0 0
    %251 = vmatprep.subr.bf16.mxu0 0
    %252 = vmatpush2.bf16.msra.mxu0 0
    %253 = vmatprep.subr.bf16.mxu0 0
    %254 = vmatpush2.bf16.msra.mxu0 0
    %255 = vmatprep.subr.bf16.mxu0 0
    %256 = vmatpush2.bf16.msra.mxu0 0
    %257 = vmatprep.mubr.bf16.mxu0 0
    %258 = vmatmul.mubr.bf16.gmra.mxu0 %v159
    %v259 = vpop.f32.mrf.mxu0
    %v260 = vadd.f32 %v211, %v259
    %v261 = vpop.f32.mrf.mxu0
    %v262 = vpop.f32.mrf.mxu0
    %v263 = vadd.f32 %v211, %v262
    %v264 = vpop.f32.mrf.mxu0
    %265 = vdwg.mxu0
    %v266 = vld [vmem:[#allocation10] sm:$0xf]
    %v267 = vld [vmem:[#allocation10 + $0x4] sm:$0xf]
    %v268 = vld [vmem:[#allocation10 + $0x8] sm:$0xf]
    %v269 = vld [vmem:[#allocation10 + $0xc] sm:$0xf]
    %v270 = vld [vmem:[#allocation11] sm:$0x1]
    %v272 = vlaneseq
    %v273 = vshrl.u32 %v272, 7
    %v274 = vsub.s32 0, %v273
    %v275 = vrot.slane %v270, %v274
    %v281 = vunpack.c.l.b16 %v266
    %v282 = vunpack.c.l.b16 %v267
    %v283 = vunpack.c.l.b16 %v268
    %v284 = vunpack.c.l.b16 %v269
    %v285 = vpack.c.b16 %v282, %v281
    %v286 = vpack.c.b16 %v284, %v283
    %289 = vmatprep.subr.bf16.mxu0 0
    %290 = vmatpush1.bf16.msra.mxu0 0
    %291 = vmatprep.subr.bf16.mxu0 0
    %292 = vmatpush1.bf16.msra.mxu0 0
    %293 = vmatprep.subr.bf16.mxu0 0
    %294 = vmatpush1.bf16.msra.mxu0 0
    %295 = vmatprep.subr.bf16.mxu0 0
    %296 = vmatpush1.bf16.msra.mxu0 0
    %297 = vmatprep.subr.bf16.mxu0 0
    %298 = vmatpush1.bf16.msra.mxu0 0
    %299 = vmatprep.subr.bf16.mxu0 0
    %300 = vmatpush1.bf16.msra.mxu0 0
    %301 = vmatprep.subr.bf16.mxu0 0
    %302 = vmatpush1.bf16.msra.mxu0 %v286
    %303 = vmatprep.subr.bf16.mxu0 0
    %304 = vmatpush1.bf16.msra.mxu0 %v285
    %305 = vmatprep.subr.bf16.mxu0 0
    %306 = vmatpush2.bf16.msra.mxu0 0
    %307 = vmatprep.subr.bf16.mxu0 0
    %308 = vmatpush2.bf16.msra.mxu0 0
    %309 = vmatprep.subr.bf16.mxu0 0
    %310 = vmatpush2.bf16.msra.mxu0 0
    %311 = vmatprep.subr.bf16.mxu0 0
    %312 = vmatpush2.bf16.msra.mxu0 0
    %313 = vmatprep.subr.bf16.mxu0 0
    %314 = vmatpush2.bf16.msra.mxu0 0
    %315 = vmatprep.subr.bf16.mxu0 0
    %316 = vmatpush2.bf16.msra.mxu0 0
    %317 = vmatprep.subr.bf16.mxu0 0
    %318 = vmatpush2.bf16.msra.mxu0 0
    %319 = vmatprep.subr.bf16.mxu0 0
    %320 = vmatpush2.bf16.msra.mxu0 0
    %321 = vmatprep.mubr.bf16.mxu0 0
    %322 = vmatmul.mubr.bf16.gmra.mxu0 %v159
    %v323 = vpop.f32.mrf.mxu0
    %v324 = vadd.f32 %v275, %v323
    %v325 = vpop.f32.mrf.mxu0
    %v326 = vpop.f32.mrf.mxu0
    %v327 = vadd.f32 %v275, %v326
    %v328 = vpop.f32.mrf.mxu0
    %329 = vdwg.mxu0
    %v330 = vpack.c.bf16 %v196, %v196
    %v331 = vpack.c.bf16 %v199, %v199
    %v332 = vpack.c.bf16 %v260, %v260
    %v333 = vpack.c.bf16 %v263, %v263
    %v334 = vpack.c.bf16 %v324, %v324
    %v335 = vpack.c.bf16 %v327, %v327
    %vm336 = vcmask 64512
    %v338 = vsel %vm336, %v330, 0
    %v341 = vsel %vm336, %v332, 0
    %343 = vmatprep.subr.bf16.mxu0 0
    %344 = vmatpush1.bf16.xpose.msra.mxu0 0
    %345 = vmatprep.subr.bf16.mxu0 0
    %346 = vmatpush1.bf16.xpose.msra.mxu0 0
    %347 = vmatprep.subr.bf16.mxu0 0
    %348 = vmatpush1.bf16.xpose.msra.mxu0 0
    %349 = vmatprep.subr.bf16.mxu0 0
    %350 = vmatpush1.bf16.xpose.msra.mxu0 0
    %351 = vmatprep.subr.bf16.mxu0 0
    %352 = vmatpush1.bf16.xpose.msra.mxu0 0
    %353 = vmatprep.subr.bf16.mxu0 0
    %354 = vmatpush1.bf16.xpose.msra.mxu0 0
    %355 = vmatprep.subr.bf16.mxu0 0
    %356 = vmatpush1.bf16.xpose.msra.mxu0 0
    %357 = vmatprep.subr.bf16.mxu0 0
    %358 = vmatpush1.bf16.xpose.msra.mxu0 %v341
    %359 = vmatprep.subr.bf16.mxu0 0
    %360 = vmatpush2.bf16.xpose.msra.mxu0 0
    %361 = vmatprep.subr.bf16.mxu0 0
    %362 = vmatpush2.bf16.xpose.msra.mxu0 0
    %363 = vmatprep.subr.bf16.mxu0 0
    %364 = vmatpush2.bf16.xpose.msra.mxu0 0
    %365 = vmatprep.subr.bf16.mxu0 0
    %366 = vmatpush2.bf16.xpose.msra.mxu0 0
    %367 = vmatprep.subr.bf16.mxu0 0
    %368 = vmatpush2.bf16.xpose.msra.mxu0 0
    %369 = vmatprep.subr.bf16.mxu0 0
    %370 = vmatpush2.bf16.xpose.msra.mxu0 0
    %371 = vmatprep.subr.bf16.mxu0 0
    %372 = vmatpush2.bf16.xpose.msra.mxu0 0
    %373 = vmatprep.subr.bf16.mxu0 0
    %374 = vmatpush2.bf16.xpose.msra.mxu0 0
    %375 = vmatprep.mubr.bf16.mxu0 0
    %376 = vmatmul.mubr.bf16.gmra.mxu0 %v338
    %v377 = vpop.f32.mrf.mxu0
    %v378 = vadd.f32 0.0, %v377
    %v379 = vpop.f32.mrf.mxu0
    %v380 = vpop.f32.mrf.mxu0
    %v381 = vpop.f32.mrf.mxu0
    %382 = vdwg.mxu0
    %v384 = vsel %vm336, %v331, 0
    %v387 = vsel %vm336, %v333, 0
    %389 = vmatprep.subr.bf16.mxu0 0
    %390 = vmatpush1.bf16.xpose.msra.mxu0 0
    %391 = vmatprep.subr.bf16.mxu0 0
    %392 = vmatpush1.bf16.xpose.msra.mxu0 0
    %393 = vmatprep.subr.bf16.mxu0 0
    %394 = vmatpush1.bf16.xpose.msra.mxu0 0
    %395 = vmatprep.subr.bf16.mxu0 0
    %396 = vmatpush1.bf16.xpose.msra.mxu0 0
    %397 = vmatprep.subr.bf16.mxu0 0
    %398 = vmatpush1.bf16.xpose.msra.mxu0 0
    %399 = vmatprep.subr.bf16.mxu0 0
    %400 = vmatpush1.bf16.xpose.msra.mxu0 0
    %401 = vmatprep.subr.bf16.mxu0 0
    %402 = vmatpush1.bf16.xpose.msra.mxu0 0
    %403 = vmatprep.subr.bf16.mxu0 0
    %404 = vmatpush1.bf16.xpose.msra.mxu0 %v387
    %405 = vmatprep.subr.bf16.mxu0 0
    %406 = vmatpush2.bf16.xpose.msra.mxu0 0
    %407 = vmatprep.subr.bf16.mxu0 0
    %408 = vmatpush2.bf16.xpose.msra.mxu0 0
    %409 = vmatprep.subr.bf16.mxu0 0
    %410 = vmatpush2.bf16.xpose.msra.mxu0 0
    %411 = vmatprep.subr.bf16.mxu0 0
    %412 = vmatpush2.bf16.xpose.msra.mxu0 0
    %413 = vmatprep.subr.bf16.mxu0 0
    %414 = vmatpush2.bf16.xpose.msra.mxu0 0
    %415 = vmatprep.subr.bf16.mxu0 0
    %416 = vmatpush2.bf16.xpose.msra.mxu0 0
    %417 = vmatprep.subr.bf16.mxu0 0
    %418 = vmatpush2.bf16.xpose.msra.mxu0 0
    %419 = vmatprep.subr.bf16.mxu0 0
    %420 = vmatpush2.bf16.xpose.msra.mxu0 0
    %421 = vmatprep.mubr.bf16.mxu0 0
    %422 = vmatmul.mubr.bf16.gmra.mxu0 %v384
    %v423 = vpop.f32.mrf.mxu0
    %v424 = vadd.f32 0.0, %v423
    %v425 = vpop.f32.mrf.mxu0
    %v426 = vpop.f32.mrf.mxu0
    %v427 = vpop.f32.mrf.mxu0
    %428 = vdwg.mxu0
    %v429 = vmul.f32 %v378, 0.35355338
    %v430 = vmul.f32 %v424, 0.35355338
    %v431 = vsel %vm336, %v429, -inf
    %432 = vmax.xlane.f32.xlu0 %v431
    %v433 = vpop.xlane.xlu0 %432
    %v434 = vsel %vm336, %v430, -inf
    %435 = vmax.xlane.f32.xlu0 %v434
    %v436 = vpop.xlane.xlu0 %435
    %v437 = vsub.f32 %v429, %v433
    %v438 = vsub.f32 %v430, %v436
    %v439 = vmul.f32 %v437, 1.442695
    %v440 = vpow.pop %v439
    %v441 = vmul.f32 %v438, 1.442695
    %v442 = vpow.pop %v441
    %v443 = vsel %vm336, %v440, 0.0
    %444 = vadd.xlane.f32.xlu0 %v443
    %v445 = vpop.xlane.xlu0 %444
    %v446 = vsel %vm336, %v442, 0.0
    %447 = vadd.xlane.f32.xlu0 %v446
    %v448 = vpop.xlane.xlu0 %447
    %v449 = vrcp.pop %v445
    %v450 = vrcp.pop %v448
    %v451 = vmul.f32 %v440, %v449
    %v452 = vmul.f32 %v442, %v450
    %v453 = vpack.c.bf16 %v451, %v451
    %v454 = vpack.c.bf16 %v452, %v452
    %v456 = vsel %vm336, %v453, 0
    %vm458 = vcmask 1043456
    %v460 = vsel %vm458, %v334, 0
    %462 = vmatprep.subr.bf16.mxu0 0
    %463 = vmatpush1.bf16.msra.mxu0 0
    %464 = vmatprep.subr.bf16.mxu0 0
    %465 = vmatpush1.bf16.msra.mxu0 0
    %466 = vmatprep.subr.bf16.mxu0 0
    %467 = vmatpush1.bf16.msra.mxu0 0
    %468 = vmatprep.subr.bf16.mxu0 0
    %469 = vmatpush1.bf16.msra.mxu0 0
    %470 = vmatprep.subr.bf16.mxu0 0
    %471 = vmatpush1.bf16.msra.mxu0 0
    %472 = vmatprep.subr.bf16.mxu0 0
    %473 = vmatpush1.bf16.msra.mxu0 0
    %474 = vmatprep.subr.bf16.mxu0 0
    %475 = vmatpush1.bf16.msra.mxu0 0
    %476 = vmatprep.subr.bf16.mxu0 0
    %477 = vmatpush1.bf16.msra.mxu0 %v460
    %478 = vmatprep.subr.bf16.mxu0 0
    %479 = vmatpush2.bf16.msra.mxu0 0
    %480 = vmatprep.subr.bf16.mxu0 0
    %481 = vmatpush2.bf16.msra.mxu0 0
    %482 = vmatprep.subr.bf16.mxu0 0
    %483 = vmatpush2.bf16.msra.mxu0 0
    %484 = vmatprep.subr.bf16.mxu0 0
    %485 = vmatpush2.bf16.msra.mxu0 0
    %486 = vmatprep.subr.bf16.mxu0 0
    %487 = vmatpush2.bf16.msra.mxu0 0
    %488 = vmatprep.subr.bf16.mxu0 0
    %489 = vmatpush2.bf16.msra.mxu0 0
    %490 = vmatprep.subr.bf16.mxu0 0
    %491 = vmatpush2.bf16.msra.mxu0 0
    %492 = vmatprep.subr.bf16.mxu0 0
    %493 = vmatpush2.bf16.msra.mxu0 0
    %494 = vmatprep.mubr.bf16.mxu0 0
    %495 = vmatmul.mubr.bf16.gmra.mxu0 %v456
    %v496 = vpop.f32.mrf.mxu0
    %v497 = vadd.f32 0.0, %v496
    %v498 = vpop.f32.mrf.mxu0
    %v499 = vpop.f32.mrf.mxu0
    %v500 = vpop.f32.mrf.mxu0
    %501 = vdwg.mxu0
    %v503 = vsel %vm336, %v454, 0
    %v506 = vsel %vm458, %v335, 0
    %508 = vmatprep.subr.bf16.mxu0 0
    %509 = vmatpush1.bf16.msra.mxu0 0
    %510 = vmatprep.subr.bf16.mxu0 0
    %511 = vmatpush1.bf16.msra.mxu0 0
    %512 = vmatprep.subr.bf16.mxu0 0
    %513 = vmatpush1.bf16.msra.mxu0 0
    %514 = vmatprep.subr.bf16.mxu0 0
    %515 = vmatpush1.bf16.msra.mxu0 0
    %516 = vmatprep.subr.bf16.mxu0 0
    %517 = vmatpush1.bf16.msra.mxu0 0
    %518 = vmatprep.subr.bf16.mxu0 0
    %519 = vmatpush1.bf16.msra.mxu0 0
    %520 = vmatprep.subr.bf16.mxu0 0
    %521 = vmatpush1.bf16.msra.mxu0 0
    %522 = vmatprep.subr.bf16.mxu0 0
    %523 = vmatpush1.bf16.msra.mxu0 %v506
    %524 = vmatprep.subr.bf16.mxu0 0
    %525 = vmatpush2.bf16.msra.mxu0 0
    %526 = vmatprep.subr.bf16.mxu0 0
    %527 = vmatpush2.bf16.msra.mxu0 0
    %528 = vmatprep.subr.bf16.mxu0 0
    %529 = vmatpush2.bf16.msra.mxu0 0
    %530 = vmatprep.subr.bf16.mxu0 0
    %531 = vmatpush2.bf16.msra.mxu0 0
    %532 = vmatprep.subr.bf16.mxu0 0
    %533 = vmatpush2.bf16.msra.mxu0 0
    %534 = vmatprep.subr.bf16.mxu0 0
    %535 = vmatpush2.bf16.msra.mxu0 0
    %536 = vmatprep.subr.bf16.mxu0 0
    %537 = vmatpush2.bf16.msra.mxu0 0
    %538 = vmatprep.subr.bf16.mxu0 0
    %539 = vmatpush2.bf16.msra.mxu0 0
    %540 = vmatprep.mubr.bf16.mxu0 0
    %541 = vmatmul.mubr.bf16.gmra.mxu0 %v503
    %v542 = vpop.f32.mrf.mxu0
    %v543 = vadd.f32 0.0, %v542
    %v544 = vpop.f32.mrf.mxu0
    %v545 = vpop.f32.mrf.mxu0
    %v546 = vpop.f32.mrf.mxu0
    %547 = vdwg.mxu0
    %549 = vrot.lane.b32.xlu0 %v330, 120
    %v550 = vpop.permute.xlu0 %549
    %552 = vrot.lane.b32.xlu0 %v332, 120
    %v553 = vpop.permute.xlu0 %552
    %v555 = vsel %vm336, %v550, 0
    %v558 = vsel %vm336, %v553, 0
    %560 = vmatprep.subr.bf16.mxu0 0
    %561 = vmatpush1.bf16.xpose.msra.mxu0 0
    %562 = vmatprep.subr.bf16.mxu0 0
    %563 = vmatpush1.bf16.xpose.msra.mxu0 0
    %564 = vmatprep.subr.bf16.mxu0 0
    %565 = vmatpush1.bf16.xpose.msra.mxu0 0
    %566 = vmatprep.subr.bf16.mxu0 0
    %567 = vmatpush1.bf16.xpose.msra.mxu0 0
    %568 = vmatprep.subr.bf16.mxu0 0
    %569 = vmatpush1.bf16.xpose.msra.mxu0 0
    %570 = vmatprep.subr.bf16.mxu0 0
    %571 = vmatpush1.bf16.xpose.msra.mxu0 0
    %572 = vmatprep.subr.bf16.mxu0 0
    %573 = vmatpush1.bf16.xpose.msra.mxu0 0
    %574 = vmatprep.subr.bf16.mxu0 0
    %575 = vmatpush1.bf16.xpose.msra.mxu0 %v558
    %576 = vmatprep.subr.bf16.mxu0 0
    %577 = vmatpush2.bf16.xpose.msra.mxu0 0
    %578 = vmatprep.subr.bf16.mxu0 0
    %579 = vmatpush2.bf16.xpose.msra.mxu0 0
    %580 = vmatprep.subr.bf16.mxu0 0
    %581 = vmatpush2.bf16.xpose.msra.mxu0 0
    %582 = vmatprep.subr.bf16.mxu0 0
    %583 = vmatpush2.bf16.xpose.msra.mxu0 0
    %584 = vmatprep.subr.bf16.mxu0 0
    %585 = vmatpush2.bf16.xpose.msra.mxu0 0
    %586 = vmatprep.subr.bf16.mxu0 0
    %587 = vmatpush2.bf16.xpose.msra.mxu0 0
    %588 = vmatprep.subr.bf16.mxu0 0
    %589 = vmatpush2.bf16.xpose.msra.mxu0 0
    %590 = vmatprep.subr.bf16.mxu0 0
    %591 = vmatpush2.bf16.xpose.msra.mxu0 0
    %592 = vmatprep.mubr.bf16.mxu0 0
    %593 = vmatmul.mubr.bf16.gmra.mxu0 %v555
    %v594 = vpop.f32.mrf.mxu0
    %v595 = vadd.f32 0.0, %v594
    %v596 = vpop.f32.mrf.mxu0
    %v597 = vpop.f32.mrf.mxu0
    %v598 = vpop.f32.mrf.mxu0
    %599 = vdwg.mxu0
    %601 = vrot.lane.b32.xlu0 %v331, 120
    %v602 = vpop.permute.xlu0 %601
    %604 = vrot.lane.b32.xlu0 %v333, 120
    %v605 = vpop.permute.xlu0 %604
    %v607 = vsel %vm336, %v602, 0
    %v610 = vsel %vm336, %v605, 0
    %612 = vmatprep.subr.bf16.mxu0 0
    %613 = vmatpush1.bf16.xpose.msra.mxu0 0
    %614 = vmatprep.subr.bf16.mxu0 0
    %615 = vmatpush1.bf16.xpose.msra.mxu0 0
    %616 = vmatprep.subr.bf16.mxu0 0
    %617 = vmatpush1.bf16.xpose.msra.mxu0 0
    %618 = vmatprep.subr.bf16.mxu0 0
    %619 = vmatpush1.bf16.xpose.msra.mxu0 0
    %620 = vmatprep.subr.bf16.mxu0 0
    %621 = vmatpush1.bf16.xpose.msra.mxu0 0
    %622 = vmatprep.subr.bf16.mxu0 0
    %623 = vmatpush1.bf16.xpose.msra.mxu0 0
    %624 = vmatprep.subr.bf16.mxu0 0
    %625 = vmatpush1.bf16.xpose.msra.mxu0 0
    %626 = vmatprep.subr.bf16.mxu0 0
    %627 = vmatpush1.bf16.xpose.msra.mxu0 %v610
    %628 = vmatprep.subr.bf16.mxu0 0
    %629 = vmatpush2.bf16.xpose.msra.mxu0 0
    %630 = vmatprep.subr.bf16.mxu0 0
    %631 = vmatpush2.bf16.xpose.msra.mxu0 0
    %632 = vmatprep.subr.bf16.mxu0 0
    %633 = vmatpush2.bf16.xpose.msra.mxu0 0
    %634 = vmatprep.subr.bf16.mxu0 0
    %635 = vmatpush2.bf16.xpose.msra.mxu0 0
    %636 = vmatprep.subr.bf16.mxu0 0
    %637 = vmatpush2.bf16.xpose.msra.mxu0 0
    %638 = vmatprep.subr.bf16.mxu0 0
    %639 = vmatpush2.bf16.xpose.msra.mxu0 0
    %640 = vmatprep.subr.bf16.mxu0 0
    %641 = vmatpush2.bf16.xpose.msra.mxu0 0
    %642 = vmatprep.subr.bf16.mxu0 0
    %643 = vmatpush2.bf16.xpose.msra.mxu0 0
    %644 = vmatprep.mubr.bf16.mxu0 0
    %645 = vmatmul.mubr.bf16.gmra.mxu0 %v607
    %v646 = vpop.f32.mrf.mxu0
    %v647 = vadd.f32 0.0, %v646
    %v648 = vpop.f32.mrf.mxu0
    %v649 = vpop.f32.mrf.mxu0
    %v650 = vpop.f32.mrf.mxu0
    %651 = vdwg.mxu0
    %v652 = vmul.f32 %v595, 0.35355338
    %v653 = vmul.f32 %v647, 0.35355338
    %v654 = vsel %vm336, %v652, -inf
    %655 = vmax.xlane.f32.xlu0 %v654
    %v656 = vpop.xlane.xlu0 %655
    %v657 = vsel %vm336, %v653, -inf
    %658 = vmax.xlane.f32.xlu0 %v657
    %v659 = vpop.xlane.xlu0 %658
    %v660 = vsub.f32 %v652, %v656
    %v661 = vsub.f32 %v653, %v659
    %v662 = vmul.f32 %v660, 1.442695
    %v663 = vpow.pop %v662
    %v664 = vmul.f32 %v661, 1.442695
    %v665 = vpow.pop %v664
    %v666 = vsel %vm336, %v663, 0.0
    %667 = vadd.xlane.f32.xlu0 %v666
    %v668 = vpop.xlane.xlu0 %667
    %v669 = vsel %vm336, %v665, 0.0
    %670 = vadd.xlane.f32.xlu0 %v669
    %v671 = vpop.xlane.xlu0 %670
    %v672 = vrcp.pop %v668
    %v673 = vrcp.pop %v671
    %v674 = vmul.f32 %v663, %v672
    %v675 = vmul.f32 %v665, %v673
    %v676 = vpack.c.bf16 %v674, %v674
    %v677 = vpack.c.bf16 %v675, %v675
    %679 = vrot.lane.b32.xlu0 %v334, 120
    %v680 = vpop.permute.xlu0 %679
    %v682 = vsel %vm336, %v676, 0
    %v685 = vsel %vm458, %v680, 0
    %687 = vmatprep.subr.bf16.mxu0 0
    %688 = vmatpush1.bf16.msra.mxu0 0
    %689 = vmatprep.subr.bf16.mxu0 0
    %690 = vmatpush1.bf16.msra.mxu0 0
    %691 = vmatprep.subr.bf16.mxu0 0
    %692 = vmatpush1.bf16.msra.mxu0 0
    %693 = vmatprep.subr.bf16.mxu0 0
    %694 = vmatpush1.bf16.msra.mxu0 0
    %695 = vmatprep.subr.bf16.mxu0 0
    %696 = vmatpush1.bf16.msra.mxu0 0
    %697 = vmatprep.subr.bf16.mxu0 0
    %698 = vmatpush1.bf16.msra.mxu0 0
    %699 = vmatprep.subr.bf16.mxu0 0
    %700 = vmatpush1.bf16.msra.mxu0 0
    %701 = vmatprep.subr.bf16.mxu0 0
    %702 = vmatpush1.bf16.msra.mxu0 %v685
    %703 = vmatprep.subr.bf16.mxu0 0
    %704 = vmatpush2.bf16.msra.mxu0 0
    %705 = vmatprep.subr.bf16.mxu0 0
    %706 = vmatpush2.bf16.msra.mxu0 0
    %707 = vmatprep.subr.bf16.mxu0 0
    %708 = vmatpush2.bf16.msra.mxu0 0
    %709 = vmatprep.subr.bf16.mxu0 0
    %710 = vmatpush2.bf16.msra.mxu0 0
    %711 = vmatprep.subr.bf16.mxu0 0
    %712 = vmatpush2.bf16.msra.mxu0 0
    %713 = vmatprep.subr.bf16.mxu0 0
    %714 = vmatpush2.bf16.msra.mxu0 0
    %715 = vmatprep.subr.bf16.mxu0 0
    %716 = vmatpush2.bf16.msra.mxu0 0
    %717 = vmatprep.subr.bf16.mxu0 0
    %718 = vmatpush2.bf16.msra.mxu0 0
    %719 = vmatprep.mubr.bf16.mxu0 0
    %720 = vmatmul.mubr.bf16.gmra.mxu0 %v682
    %v721 = vpop.f32.mrf.mxu0
    %v722 = vadd.f32 0.0, %v721
    %v723 = vpop.f32.mrf.mxu0
    %v724 = vpop.f32.mrf.mxu0
    %v725 = vpop.f32.mrf.mxu0
    %726 = vdwg.mxu0
    %728 = vrot.lane.b32.xlu0 %v335, 120
    %v729 = vpop.permute.xlu0 %728
    %v731 = vsel %vm336, %v677, 0
    %v734 = vsel %vm458, %v729, 0
    %736 = vmatprep.subr.bf16.mxu0 0
    %737 = vmatpush1.bf16.msra.mxu0 0
    %738 = vmatprep.subr.bf16.mxu0 0
    %739 = vmatpush1.bf16.msra.mxu0 0
    %740 = vmatprep.subr.bf16.mxu0 0
    %741 = vmatpush1.bf16.msra.mxu0 0
    %742 = vmatprep.subr.bf16.mxu0 0
    %743 = vmatpush1.bf16.msra.mxu0 0
    %744 = vmatprep.subr.bf16.mxu0 0
    %745 = vmatpush1.bf16.msra.mxu0 0
    %746 = vmatprep.subr.bf16.mxu0 0
    %747 = vmatpush1.bf16.msra.mxu0 0
    %748 = vmatprep.subr.bf16.mxu0 0
    %749 = vmatpush1.bf16.msra.mxu0 0
    %750 = vmatprep.subr.bf16.mxu0 0
    %751 = vmatpush1.bf16.msra.mxu0 %v734
    %752 = vmatprep.subr.bf16.mxu0 0
    %753 = vmatpush2.bf16.msra.mxu0 0
    %754 = vmatprep.subr.bf16.mxu0 0
    %755 = vmatpush2.bf16.msra.mxu0 0
    %756 = vmatprep.subr.bf16.mxu0 0
    %757 = vmatpush2.bf16.msra.mxu0 0
    %758 = vmatprep.subr.bf16.mxu0 0
    %759 = vmatpush2.bf16.msra.mxu0 0
    %760 = vmatprep.subr.bf16.mxu0 0
    %761 = vmatpush2.bf16.msra.mxu0 0
    %762 = vmatprep.subr.bf16.mxu0 0
    %763 = vmatpush2.bf16.msra.mxu0 0
    %764 = vmatprep.subr.bf16.mxu0 0
    %765 = vmatpush2.bf16.msra.mxu0 0
    %766 = vmatprep.subr.bf16.mxu0 0
    %767 = vmatpush2.bf16.msra.mxu0 0
    %768 = vmatprep.mubr.bf16.mxu0 0
    %769 = vmatmul.mubr.bf16.gmra.mxu0 %v731
    %v770 = vpop.f32.mrf.mxu0
    %v771 = vadd.f32 0.0, %v770
    %v772 = vpop.f32.mrf.mxu0
    %v773 = vpop.f32.mrf.mxu0
    %v774 = vpop.f32.mrf.mxu0
    %775 = vdwg.mxu0
    %776 = vrot.lane.b32.xlu0 %v330, 112
    %v777 = vpop.permute.xlu0 %776
    %778 = vrot.lane.b32.xlu0 %v332, 112
    %v779 = vpop.permute.xlu0 %778
    %v781 = vsel %vm336, %v777, 0
    %v784 = vsel %vm336, %v779, 0
    %786 = vmatprep.subr.bf16.mxu0 0
    %787 = vmatpush1.bf16.xpose.msra.mxu0 0
    %788 = vmatprep.subr.bf16.mxu0 0
    %789 = vmatpush1.bf16.xpose.msra.mxu0 0
    %790 = vmatprep.subr.bf16.mxu0 0
    %791 = vmatpush1.bf16.xpose.msra.mxu0 0
    %792 = vmatprep.subr.bf16.mxu0 0
    %793 = vmatpush1.bf16.xpose.msra.mxu0 0
    %794 = vmatprep.subr.bf16.mxu0 0
    %795 = vmatpush1.bf16.xpose.msra.mxu0 0
    %796 = vmatprep.subr.bf16.mxu0 0
    %797 = vmatpush1.bf16.xpose.msra.mxu0 0
    %798 = vmatprep.subr.bf16.mxu0 0
    %799 = vmatpush1.bf16.xpose.msra.mxu0 0
    %800 = vmatprep.subr.bf16.mxu0 0
    %801 = vmatpush1.bf16.xpose.msra.mxu0 %v784
    %802 = vmatprep.subr.bf16.mxu0 0
    %803 = vmatpush2.bf16.xpose.msra.mxu0 0
    %804 = vmatprep.subr.bf16.mxu0 0
    %805 = vmatpush2.bf16.xpose.msra.mxu0 0
    %806 = vmatprep.subr.bf16.mxu0 0
    %807 = vmatpush2.bf16.xpose.msra.mxu0 0
    %808 = vmatprep.subr.bf16.mxu0 0
    %809 = vmatpush2.bf16.xpose.msra.mxu0 0
    %810 = vmatprep.subr.bf16.mxu0 0
    %811 = vmatpush2.bf16.xpose.msra.mxu0 0
    %812 = vmatprep.subr.bf16.mxu0 0
    %813 = vmatpush2.bf16.xpose.msra.mxu0 0
    %814 = vmatprep.subr.bf16.mxu0 0
    %815 = vmatpush2.bf16.xpose.msra.mxu0 0
    %816 = vmatprep.subr.bf16.mxu0 0
    %817 = vmatpush2.bf16.xpose.msra.mxu0 0
    %818 = vmatprep.mubr.bf16.mxu0 0
    %819 = vmatmul.mubr.bf16.gmra.mxu0 %v781
    %v820 = vpop.f32.mrf.mxu0
    %v821 = vadd.f32 0.0, %v820
    %v822 = vpop.f32.mrf.mxu0
    %v823 = vpop.f32.mrf.mxu0
    %v824 = vpop.f32.mrf.mxu0
    %825 = vdwg.mxu0
    %826 = vrot.lane.b32.xlu0 %v331, 112
    %v827 = vpop.permute.xlu0 %826
    %828 = vrot.lane.b32.xlu0 %v333, 112
    %v829 = vpop.permute.xlu0 %828
    %v831 = vsel %vm336, %v827, 0
    %v834 = vsel %vm336, %v829, 0
    %836 = vmatprep.subr.bf16.mxu0 0
    %837 = vmatpush1.bf16.xpose.msra.mxu0 0
    %838 = vmatprep.subr.bf16.mxu0 0
    %839 = vmatpush1.bf16.xpose.msra.mxu0 0
    %840 = vmatprep.subr.bf16.mxu0 0
    %841 = vmatpush1.bf16.xpose.msra.mxu0 0
    %842 = vmatprep.subr.bf16.mxu0 0
    %843 = vmatpush1.bf16.xpose.msra.mxu0 0
    %844 = vmatprep.subr.bf16.mxu0 0
    %845 = vmatpush1.bf16.xpose.msra.mxu0 0
    %846 = vmatprep.subr.bf16.mxu0 0
    %847 = vmatpush1.bf16.xpose.msra.mxu0 0
    %848 = vmatprep.subr.bf16.mxu0 0
    %849 = vmatpush1.bf16.xpose.msra.mxu0 0
    %850 = vmatprep.subr.bf16.mxu0 0
    %851 = vmatpush1.bf16.xpose.msra.mxu0 %v834
    %852 = vmatprep.subr.bf16.mxu0 0
    %853 = vmatpush2.bf16.xpose.msra.mxu0 0
    %854 = vmatprep.subr.bf16.mxu0 0
    %855 = vmatpush2.bf16.xpose.msra.mxu0 0
    %856 = vmatprep.subr.bf16.mxu0 0
    %857 = vmatpush2.bf16.xpose.msra.mxu0 0
    %858 = vmatprep.subr.bf16.mxu0 0
    %859 = vmatpush2.bf16.xpose.msra.mxu0 0
    %860 = vmatprep.subr.bf16.mxu0 0
    %861 = vmatpush2.bf16.xpose.msra.mxu0 0
    %862 = vmatprep.subr.bf16.mxu0 0
    %863 = vmatpush2.bf16.xpose.msra.mxu0 0
    %864 = vmatprep.subr.bf16.mxu0 0
    %865 = vmatpush2.bf16.xpose.msra.mxu0 0
    %866 = vmatprep.subr.bf16.mxu0 0
    %867 = vmatpush2.bf16.xpose.msra.mxu0 0
    %868 = vmatprep.mubr.bf16.mxu0 0
    %869 = vmatmul.mubr.bf16.gmra.mxu0 %v831
    %v870 = vpop.f32.mrf.mxu0
    %v871 = vadd.f32 0.0, %v870
    %v872 = vpop.f32.mrf.mxu0
    %v873 = vpop.f32.mrf.mxu0
    %v874 = vpop.f32.mrf.mxu0
    %875 = vdwg.mxu0
    %v876 = vmul.f32 %v821, 0.35355338
    %v877 = vmul.f32 %v871, 0.35355338
    %v878 = vsel %vm336, %v876, -inf
    %879 = vmax.xlane.f32.xlu0 %v878
    %v880 = vpop.xlane.xlu0 %879
    %v881 = vsel %vm336, %v877, -inf
    %882 = vmax.xlane.f32.xlu0 %v881
    %v883 = vpop.xlane.xlu0 %882
    %v884 = vsub.f32 %v876, %v880
    %v885 = vsub.f32 %v877, %v883
    %v886 = vmul.f32 %v884, 1.442695
    %v887 = vpow.pop %v886
    %v888 = vmul.f32 %v885, 1.442695
    %v889 = vpow.pop %v888
    %v890 = vsel %vm336, %v887, 0.0
    %891 = vadd.xlane.f32.xlu0 %v890
    %v892 = vpop.xlane.xlu0 %891
    %v893 = vsel %vm336, %v889, 0.0
    %894 = vadd.xlane.f32.xlu0 %v893
    %v895 = vpop.xlane.xlu0 %894
    %v896 = vrcp.pop %v892
    %v897 = vrcp.pop %v895
    %v898 = vmul.f32 %v887, %v896
    %v899 = vmul.f32 %v889, %v897
    %v900 = vpack.c.bf16 %v898, %v898
    %v901 = vpack.c.bf16 %v899, %v899
    %902 = vrot.lane.b32.xlu0 %v334, 112
    %v903 = vpop.permute.xlu0 %902
    %v905 = vsel %vm336, %v900, 0
    %v908 = vsel %vm458, %v903, 0
    %910 = vmatprep.subr.bf16.mxu0 0
    %911 = vmatpush1.bf16.msra.mxu0 0
    %912 = vmatprep.subr.bf16.mxu0 0
    %913 = vmatpush1.bf16.msra.mxu0 0
    %914 = vmatprep.subr.bf16.mxu0 0
    %915 = vmatpush1.bf16.msra.mxu0 0
    %916 = vmatprep.subr.bf16.mxu0 0
    %917 = vmatpush1.bf16.msra.mxu0 0
    %918 = vmatprep.subr.bf16.mxu0 0
    %919 = vmatpush1.bf16.msra.mxu0 0
    %920 = vmatprep.subr.bf16.mxu0 0
    %921 = vmatpush1.bf16.msra.mxu0 0
    %922 = vmatprep.subr.bf16.mxu0 0
    %923 = vmatpush1.bf16.msra.mxu0 0
    %924 = vmatprep.subr.bf16.mxu0 0
    %925 = vmatpush1.bf16.msra.mxu0 %v908
    %926 = vmatprep.subr.bf16.mxu0 0
    %927 = vmatpush2.bf16.msra.mxu0 0
    %928 = vmatprep.subr.bf16.mxu0 0
    %929 = vmatpush2.bf16.msra.mxu0 0
    %930 = vmatprep.subr.bf16.mxu0 0
    %931 = vmatpush2.bf16.msra.mxu0 0
    %932 = vmatprep.subr.bf16.mxu0 0
    %933 = vmatpush2.bf16.msra.mxu0 0
    %934 = vmatprep.subr.bf16.mxu0 0
    %935 = vmatpush2.bf16.msra.mxu0 0
    %936 = vmatprep.subr.bf16.mxu0 0
    %937 = vmatpush2.bf16.msra.mxu0 0
    %938 = vmatprep.subr.bf16.mxu0 0
    %939 = vmatpush2.bf16.msra.mxu0 0
    %940 = vmatprep.subr.bf16.mxu0 0
    %941 = vmatpush2.bf16.msra.mxu0 0
    %942 = vmatprep.mubr.bf16.mxu0 0
    %943 = vmatmul.mubr.bf16.gmra.mxu0 %v905
    %v944 = vpop.f32.mrf.mxu0
    %v945 = vadd.f32 0.0, %v944
    %v946 = vpop.f32.mrf.mxu0
    %v947 = vpop.f32.mrf.mxu0
    %v948 = vpop.f32.mrf.mxu0
    %949 = vdwg.mxu0
    %950 = vrot.lane.b32.xlu0 %v335, 112
    %v951 = vpop.permute.xlu0 %950
    %v953 = vsel %vm336, %v901, 0
    %v956 = vsel %vm458, %v951, 0
    %958 = vmatprep.subr.bf16.mxu0 0
    %959 = vmatpush1.bf16.msra.mxu0 0
    %960 = vmatprep.subr.bf16.mxu0 0
    %961 = vmatpush1.bf16.msra.mxu0 0
    %962 = vmatprep.subr.bf16.mxu0 0
    %963 = vmatpush1.bf16.msra.mxu0 0
    %964 = vmatprep.subr.bf16.mxu0 0
    %965 = vmatpush1.bf16.msra.mxu0 0
    %966 = vmatprep.subr.bf16.mxu0 0
    %967 = vmatpush1.bf16.msra.mxu0 0
    %968 = vmatprep.subr.bf16.mxu0 0
    %969 = vmatpush1.bf16.msra.mxu0 0
    %970 = vmatprep.subr.bf16.mxu0 0
    %971 = vmatpush1.bf16.msra.mxu0 0
    %972 = vmatprep.subr.bf16.mxu0 0
    %973 = vmatpush1.bf16.msra.mxu0 %v956
    %974 = vmatprep.subr.bf16.mxu0 0
    %975 = vmatpush2.bf16.msra.mxu0 0
    %976 = vmatprep.subr.bf16.mxu0 0
    %977 = vmatpush2.bf16.msra.mxu0 0
    %978 = vmatprep.subr.bf16.mxu0 0
    %979 = vmatpush2.bf16.msra.mxu0 0
    %980 = vmatprep.subr.bf16.mxu0 0
    %981 = vmatpush2.bf16.msra.mxu0 0
    %982 = vmatprep.subr.bf16.mxu0 0
    %983 = vmatpush2.bf16.msra.mxu0 0
    %984 = vmatprep.subr.bf16.mxu0 0
    %985 = vmatpush2.bf16.msra.mxu0 0
    %986 = vmatprep.subr.bf16.mxu0 0
    %987 = vmatpush2.bf16.msra.mxu0 0
    %988 = vmatprep.subr.bf16.mxu0 0
    %989 = vmatpush2.bf16.msra.mxu0 0
    %990 = vmatprep.mubr.bf16.mxu0 0
    %991 = vmatmul.mubr.bf16.gmra.mxu0 %v953
    %v992 = vpop.f32.mrf.mxu0
    %v993 = vadd.f32 0.0, %v992
    %v994 = vpop.f32.mrf.mxu0
    %v995 = vpop.f32.mrf.mxu0
    %v996 = vpop.f32.mrf.mxu0
    %997 = vdwg.mxu0
    %998 = vrot.lane.b32.xlu0 %v330, 104
    %v999 = vpop.permute.xlu0 %998
    %1000 = vrot.lane.b32.xlu0 %v332, 104
    %v1001 = vpop.permute.xlu0 %1000
    %v1003 = vsel %vm336, %v999, 0
    %v1006 = vsel %vm336, %v1001, 0
    %1008 = vmatprep.subr.bf16.mxu0 0
    %1009 = vmatpush1.bf16.xpose.msra.mxu0 0
    %1010 = vmatprep.subr.bf16.mxu0 0
    %1011 = vmatpush1.bf16.xpose.msra.mxu0 0
    %1012 = vmatprep.subr.bf16.mxu0 0
    %1013 = vmatpush1.bf16.xpose.msra.mxu0 0
    %1014 = vmatprep.subr.bf16.mxu0 0
    %1015 = vmatpush1.bf16.xpose.msra.mxu0 0
    %1016 = vmatprep.subr.bf16.mxu0 0
    %1017 = vmatpush1.bf16.xpose.msra.mxu0 0
    %1018 = vmatprep.subr.bf16.mxu0 0
    %1019 = vmatpush1.bf16.xpose.msra.mxu0 0
    %1020 = vmatprep.subr.bf16.mxu0 0
    %1021 = vmatpush1.bf16.xpose.msra.mxu0 0
    %1022 = vmatprep.subr.bf16.mxu0 0
    %1023 = vmatpush1.bf16.xpose.msra.mxu0 %v1006
    %1024 = vmatprep.subr.bf16.mxu0 0
    %1025 = vmatpush2.bf16.xpose.msra.mxu0 0
    %1026 = vmatprep.subr.bf16.mxu0 0
    %1027 = vmatpush2.bf16.xpose.msra.mxu0 0
    %1028 = vmatprep.subr.bf16.mxu0 0
    %1029 = vmatpush2.bf16.xpose.msra.mxu0 0
    %1030 = vmatprep.subr.bf16.mxu0 0
    %1031 = vmatpush2.bf16.xpose.msra.mxu0 0
    %1032 = vmatprep.subr.bf16.mxu0 0
    %1033 = vmatpush2.bf16.xpose.msra.mxu0 0
    %1034 = vmatprep.subr.bf16.mxu0 0
    %1035 = vmatpush2.bf16.xpose.msra.mxu0 0
    %1036 = vmatprep.subr.bf16.mxu0 0
    %1037 = vmatpush2.bf16.xpose.msra.mxu0 0
    %1038 = vmatprep.subr.bf16.mxu0 0
    %1039 = vmatpush2.bf16.xpose.msra.mxu0 0
    %1040 = vmatprep.mubr.bf16.mxu0 0
    %1041 = vmatmul.mubr.bf16.gmra.mxu0 %v1003
    %v1042 = vpop.f32.mrf.mxu0
    %v1043 = vadd.f32 0.0, %v1042
    %v1044 = vpop.f32.mrf.mxu0
    %v1045 = vpop.f32.mrf.mxu0
    %v1046 = vpop.f32.mrf.mxu0
    %1047 = vdwg.mxu0
    %1048 = vrot.lane.b32.xlu0 %v331, 104
    %v1049 = vpop.permute.xlu0 %1048
    %1050 = vrot.lane.b32.xlu0 %v333, 104
    %v1051 = vpop.permute.xlu0 %1050
    %v1053 = vsel %vm336, %v1049, 0
    %v1056 = vsel %vm336, %v1051, 0
    %1058 = vmatprep.subr.bf16.mxu0 0
    %1059 = vmatpush1.bf16.xpose.msra.mxu0 0
    %1060 = vmatprep.subr.bf16.mxu0 0
    %1061 = vmatpush1.bf16.xpose.msra.mxu0 0
    %1062 = vmatprep.subr.bf16.mxu0 0
    %1063 = vmatpush1.bf16.xpose.msra.mxu0 0
    %1064 = vmatprep.subr.bf16.mxu0 0
    %1065 = vmatpush1.bf16.xpose.msra.mxu0 0
    %1066 = vmatprep.subr.bf16.mxu0 0
    %1067 = vmatpush1.bf16.xpose.msra.mxu0 0
    %1068 = vmatprep.subr.bf16.mxu0 0
    %1069 = vmatpush1.bf16.xpose.msra.mxu0 0
    %1070 = vmatprep.subr.bf16.mxu0 0
    %1071 = vmatpush1.bf16.xpose.msra.mxu0 0
    %1072 = vmatprep.subr.bf16.mxu0 0
    %1073 = vmatpush1.bf16.xpose.msra.mxu0 %v1056
    %1074 = vmatprep.subr.bf16.mxu0 0
    %1075 = vmatpush2.bf16.xpose.msra.mxu0 0
    %1076 = vmatprep.subr.bf16.mxu0 0
    %1077 = vmatpush2.bf16.xpose.msra.mxu0 0
    %1078 = vmatprep.subr.bf16.mxu0 0
    %1079 = vmatpush2.bf16.xpose.msra.mxu0 0
    %1080 = vmatprep.subr.bf16.mxu0 0
    %1081 = vmatpush2.bf16.xpose.msra.mxu0 0
    %1082 = vmatprep.subr.bf16.mxu0 0
    %1083 = vmatpush2.bf16.xpose.msra.mxu0 0
    %1084 = vmatprep.subr.bf16.mxu0 0
    %1085 = vmatpush2.bf16.xpose.msra.mxu0 0
    %1086 = vmatprep.subr.bf16.mxu0 0
    %1087 = vmatpush2.bf16.xpose.msra.mxu0 0
    %1088 = vmatprep.subr.bf16.mxu0 0
    %1089 = vmatpush2.bf16.xpose.msra.mxu0 0
    %1090 = vmatprep.mubr.bf16.mxu0 0
    %1091 = vmatmul.mubr.bf16.gmra.mxu0 %v1053
    %v1092 = vpop.f32.mrf.mxu0
    %v1093 = vadd.f32 0.0, %v1092
    %v1094 = vpop.f32.mrf.mxu0
    %v1095 = vpop.f32.mrf.mxu0
    %v1096 = vpop.f32.mrf.mxu0
    %1097 = vdwg.mxu0
    %v1098 = vmul.f32 %v1043, 0.35355338
    %v1099 = vmul.f32 %v1093, 0.35355338
    %v1100 = vsel %vm336, %v1098, -inf
    %1101 = vmax.xlane.f32.xlu0 %v1100
    %v1102 = vpop.xlane.xlu0 %1101
    %v1103 = vsel %vm336, %v1099, -inf
    %1104 = vmax.xlane.f32.xlu0 %v1103
    %v1105 = vpop.xlane.xlu0 %1104
    %v1106 = vsub.f32 %v1098, %v1102
    %v1107 = vsub.f32 %v1099, %v1105
    %v1108 = vmul.f32 %v1106, 1.442695
    %v1109 = vpow.pop %v1108
    %v1110 = vmul.f32 %v1107, 1.442695
    %v1111 = vpow.pop %v1110
    %v1112 = vsel %vm336, %v1109, 0.0
    %1113 = vadd.xlane.f32.xlu0 %v1112
    %v1114 = vpop.xlane.xlu0 %1113
    %v1115 = vsel %vm336, %v1111, 0.0
    %1116 = vadd.xlane.f32.xlu0 %v1115
    %v1117 = vpop.xlane.xlu0 %1116
    %v1118 = vrcp.pop %v1114
    %v1119 = vrcp.pop %v1117
    %v1120 = vmul.f32 %v1109, %v1118
    %v1121 = vmul.f32 %v1111, %v1119
    %v1122 = vpack.c.bf16 %v1120, %v1120
    %v1123 = vpack.c.bf16 %v1121, %v1121
    %1124 = vrot.lane.b32.xlu0 %v334, 104
    %v1125 = vpop.permute.xlu0 %1124
    %v1127 = vsel %vm336, %v1122, 0
    %v1130 = vsel %vm458, %v1125, 0
    %1132 = vmatprep.subr.bf16.mxu0 0
    %1133 = vmatpush1.bf16.msra.mxu0 0
    %1134 = vmatprep.subr.bf16.mxu0 0
    %1135 = vmatpush1.bf16.msra.mxu0 0
    %1136 = vmatprep.subr.bf16.mxu0 0
    %1137 = vmatpush1.bf16.msra.mxu0 0
    %1138 = vmatprep.subr.bf16.mxu0 0
    %1139 = vmatpush1.bf16.msra.mxu0 0
    %1140 = vmatprep.subr.bf16.mxu0 0
    %1141 = vmatpush1.bf16.msra.mxu0 0
    %1142 = vmatprep.subr.bf16.mxu0 0
    %1143 = vmatpush1.bf16.msra.mxu0 0
    %1144 = vmatprep.subr.bf16.mxu0 0
    %1145 = vmatpush1.bf16.msra.mxu0 0
    %1146 = vmatprep.subr.bf16.mxu0 0
    %1147 = vmatpush1.bf16.msra.mxu0 %v1130
    %1148 = vmatprep.subr.bf16.mxu0 0
    %1149 = vmatpush2.bf16.msra.mxu0 0
    %1150 = vmatprep.subr.bf16.mxu0 0
    %1151 = vmatpush2.bf16.msra.mxu0 0
    %1152 = vmatprep.subr.bf16.mxu0 0
    %1153 = vmatpush2.bf16.msra.mxu0 0
    %1154 = vmatprep.subr.bf16.mxu0 0
    %1155 = vmatpush2.bf16.msra.mxu0 0
    %1156 = vmatprep.subr.bf16.mxu0 0
    %1157 = vmatpush2.bf16.msra.mxu0 0
    %1158 = vmatprep.subr.bf16.mxu0 0
    %1159 = vmatpush2.bf16.msra.mxu0 0
    %1160 = vmatprep.subr.bf16.mxu0 0
    %1161 = vmatpush2.bf16.msra.mxu0 0
    %1162 = vmatprep.subr.bf16.mxu0 0
    %1163 = vmatpush2.bf16.msra.mxu0 0
    %1164 = vmatprep.mubr.bf16.mxu0 0
    %1165 = vmatmul.mubr.bf16.gmra.mxu0 %v1127
    %v1166 = vpop.f32.mrf.mxu0
    %v1167 = vadd.f32 0.0, %v1166
    %v1168 = vpop.f32.mrf.mxu0
    %v1169 = vpop.f32.mrf.mxu0
    %v1170 = vpop.f32.mrf.mxu0
    %1171 = vdwg.mxu0
    %1172 = vrot.lane.b32.xlu0 %v335, 104
    %v1173 = vpop.permute.xlu0 %1172
    %v1175 = vsel %vm336, %v1123, 0
    %v1178 = vsel %vm458, %v1173, 0
    %1180 = vmatprep.subr.bf16.mxu0 0
    %1181 = vmatpush1.bf16.msra.mxu0 0
    %1182 = vmatprep.subr.bf16.mxu0 0
    %1183 = vmatpush1.bf16.msra.mxu0 0
    %1184 = vmatprep.subr.bf16.mxu0 0
    %1185 = vmatpush1.bf16.msra.mxu0 0
    %1186 = vmatprep.subr.bf16.mxu0 0
    %1187 = vmatpush1.bf16.msra.mxu0 0
    %1188 = vmatprep.subr.bf16.mxu0 0
    %1189 = vmatpush1.bf16.msra.mxu0 0
    %1190 = vmatprep.subr.bf16.mxu0 0
    %1191 = vmatpush1.bf16.msra.mxu0 0
    %1192 = vmatprep.subr.bf16.mxu0 0
    %1193 = vmatpush1.bf16.msra.mxu0 0
    %1194 = vmatprep.subr.bf16.mxu0 0
    %1195 = vmatpush1.bf16.msra.mxu0 %v1178
    %1196 = vmatprep.subr.bf16.mxu0 0
    %1197 = vmatpush2.bf16.msra.mxu0 0
    %1198 = vmatprep.subr.bf16.mxu0 0
    %1199 = vmatpush2.bf16.msra.mxu0 0
    %1200 = vmatprep.subr.bf16.mxu0 0
    %1201 = vmatpush2.bf16.msra.mxu0 0
    %1202 = vmatprep.subr.bf16.mxu0 0
    %1203 = vmatpush2.bf16.msra.mxu0 0
    %1204 = vmatprep.subr.bf16.mxu0 0
    %1205 = vmatpush2.bf16.msra.mxu0 0
    %1206 = vmatprep.subr.bf16.mxu0 0
    %1207 = vmatpush2.bf16.msra.mxu0 0
    %1208 = vmatprep.subr.bf16.mxu0 0
    %1209 = vmatpush2.bf16.msra.mxu0 0
    %1210 = vmatprep.subr.bf16.mxu0 0
    %1211 = vmatpush2.bf16.msra.mxu0 0
    %1212 = vmatprep.mubr.bf16.mxu0 0
    %1213 = vmatmul.mubr.bf16.gmra.mxu0 %v1175
    %v1214 = vpop.f32.mrf.mxu0
    %v1215 = vadd.f32 0.0, %v1214
    %v1216 = vpop.f32.mrf.mxu0
    %v1217 = vpop.f32.mrf.mxu0
    %v1218 = vpop.f32.mrf.mxu0
    %1219 = vdwg.mxu0
    %1222 = vrot.lane.b32.xlu0 %v722, 8
    %v1223 = vpop.permute.xlu0 %1222
    %1224 = vrot.lane.b32.xlu0 %v771, 8
    %v1225 = vpop.permute.xlu0 %1224
    %1230 = vrot.lane.b32.xlu0 %v945, 16
    %v1231 = vpop.permute.xlu0 %1230
    %1232 = vrot.lane.b32.xlu0 %v993, 16
    %v1233 = vpop.permute.xlu0 %1232
    %1238 = vrot.lane.b32.xlu0 %v1167, 24
    %v1239 = vpop.permute.xlu0 %1238
    %1240 = vrot.lane.b32.xlu0 %v1215, 24
    %v1241 = vpop.permute.xlu0 %1240
    %v1244 = vsel %vm336, %v497, %v1223
    %v1245 = vsel %vm336, %v543, %v1225
    %vm1246 = vcmask 130048
    %v1247 = vsel %vm1246, %v1244, %v1231
    %v1248 = vsel %vm1246, %v1245, %v1233
    %vm1249 = vcmask 195584
    %v1250 = vsel %vm1249, %v1247, %v1239
    %v1251 = vsel %vm1249, %v1248, %v1241
    %v1252 = vpack.c.bf16 %v1251, %v1250
    %v1253 = vld [vmem:[%s7] sm:$0xf]
    %v1254 = vld [vmem:[%s7 + $0x4] sm:$0xf]
    %v1255 = vld [vmem:[%s7 + $0x8] sm:$0xf]
    %v1256 = vld [vmem:[%s7 + $0xc] sm:$0xf]
    %v1257 = vld [vmem:[#allocation13] sm:$0x1]
    %v1259 = vlaneseq
    %v1260 = vshrl.u32 %v1259, 7
    %v1261 = vsub.s32 0, %v1260
    %v1262 = vrot.slane %v1257, %v1261
    %v1268 = vunpack.c.l.b16 %v1253
    %v1269 = vunpack.c.l.b16 %v1254
    %v1270 = vunpack.c.l.b16 %v1255
    %v1271 = vunpack.c.l.b16 %v1256
    %v1272 = vpack.c.b16 %v1269, %v1268
    %v1273 = vpack.c.b16 %v1271, %v1270
    %v1277 = vsel %vm157, %v1252, 0
    %1279 = vmatprep.subr.bf16.mxu0 0
    %1280 = vmatpush1.bf16.msra.mxu0 0
    %1281 = vmatprep.subr.bf16.mxu0 0
    %1282 = vmatpush1.bf16.msra.mxu0 0
    %1283 = vmatprep.subr.bf16.mxu0 0
    %1284 = vmatpush1.bf16.msra.mxu0 0
    %1285 = vmatprep.subr.bf16.mxu0 0
    %1286 = vmatpush1.bf16.msra.mxu0 0
    %1287 = vmatprep.subr.bf16.mxu0 0
    %1288 = vmatpush1.bf16.msra.mxu0 0
    %1289 = vmatprep.subr.bf16.mxu0 0
    %1290 = vmatpush1.bf16.msra.mxu0 0
    %1291 = vmatprep.subr.bf16.mxu0 0
    %1292 = vmatpush1.bf16.msra.mxu0 %v1273
    %1293 = vmatprep.subr.bf16.mxu0 0
    %1294 = vmatpush1.bf16.msra.mxu0 %v1272
    %1295 = vmatprep.subr.bf16.mxu0 0
    %1296 = vmatpush2.bf16.msra.mxu0 0
    %1297 = vmatprep.subr.bf16.mxu0 0
    %1298 = vmatpush2.bf16.msra.mxu0 0
    %1299 = vmatprep.subr.bf16.mxu0 0
    %1300 = vmatpush2.bf16.msra.mxu0 0
    %1301 = vmatprep.subr.bf16.mxu0 0
    %1302 = vmatpush2.bf16.msra.mxu0 0
    %1303 = vmatprep.subr.bf16.mxu0 0
    %1304 = vmatpush2.bf16.msra.mxu0 0
    %1305 = vmatprep.subr.bf16.mxu0 0
    %1306 = vmatpush2.bf16.msra.mxu0 0
    %1307 = vmatprep.subr.bf16.mxu0 0
    %1308 = vmatpush2.bf16.msra.mxu0 0
    %1309 = vmatprep.subr.bf16.mxu0 0
    %1310 = vmatpush2.bf16.msra.mxu0 0
    %1311 = vmatprep.mubr.bf16.mxu0 0
    %1312 = vmatmul.mubr.bf16.gmra.mxu0 %v1277
    %v1313 = vpop.f32.mrf.mxu0
    %v1314 = vadd.f32 %v1262, %v1313
    %v1315 = vpop.f32.mrf.mxu0
    %v1316 = vpop.f32.mrf.mxu0
    %v1317 = vadd.f32 %v1262, %v1316
    %v1318 = vpop.f32.mrf.mxu0
    %1319 = vdwg.mxu0
    %v1320 = vsel %vm157, %v1314, -inf
    %v1321 = vrot.slane %v1320, 4
    %v1322 = vmax.f32 %v1320, %v1321
    %v1323 = vrot.slane %v1322, 2
    %v1324 = vmax.f32 %v1322, %v1323
    %v1325 = vrot.slane %v1324, 1
    %v1326 = vmax.f32 %v1324, %v1325
    %v1327 = vsel %vm157, %v1317, -inf
    %v1328 = vrot.slane %v1327, 4
    %v1329 = vmax.f32 %v1327, %v1328
    %v1330 = vrot.slane %v1329, 2
    %v1331 = vmax.f32 %v1329, %v1330
    %v1332 = vrot.slane %v1331, 1
    %v1333 = vmax.f32 %v1331, %v1332
    %v1334 = vpack.c.bf16 %v1326, %v1326
    %v1335 = vpack.c.bf16 %v1333, %v1333
    %v1336 = vld [vmem:[%s9] sm:$0xf]
    %v1337 = vld [vmem:[%s9 + $0x4] sm:$0xf]
    %v1338 = vld [vmem:[%s9 + $0x8] sm:$0xf]
    %v1339 = vld [vmem:[%s9 + $0xc] sm:$0xf]
    %v1340 = vld [vmem:[%s10] sm:$0x1]
    %v1342 = vlaneseq
    %v1343 = vshrl.u32 %v1342, 7
    %v1344 = vsub.s32 0, %v1343
    %v1345 = vrot.slane %v1340, %v1344
    %v1349 = vunpack.c.l.b16 %v1334
    %v1350 = vunpack.c.l.b16 %v1335
    %vm1351 = vcmask 1041409
    %v1352 = vsel %vm1351, %v1350, %v1349
    %v1353 = vpack.c.b16 %v1352, %v1352
    %v1358 = vunpack.c.l.b16 %v1336
    %v1359 = vunpack.c.l.b16 %v1337
    %v1360 = vunpack.c.l.b16 %v1338
    %v1361 = vunpack.c.l.b16 %v1339
    %v1362 = vpack.c.b16 %v1359, %v1358
    %v1363 = vpack.c.b16 %v1361, %v1360
    %v1367 = vsel %vm157, %v1353, 0
    %1369 = vmatprep.subr.bf16.mxu0 0
    %1370 = vmatpush1.bf16.msra.mxu0 0
    %1371 = vmatprep.subr.bf16.mxu0 0
    %1372 = vmatpush1.bf16.msra.mxu0 0
    %1373 = vmatprep.subr.bf16.mxu0 0
    %1374 = vmatpush1.bf16.msra.mxu0 0
    %1375 = vmatprep.subr.bf16.mxu0 0
    %1376 = vmatpush1.bf16.msra.mxu0 0
    %1377 = vmatprep.subr.bf16.mxu0 0
    %1378 = vmatpush1.bf16.msra.mxu0 0
    %1379 = vmatprep.subr.bf16.mxu0 0
    %1380 = vmatpush1.bf16.msra.mxu0 0
    %1381 = vmatprep.subr.bf16.mxu0 0
    %1382 = vmatpush1.bf16.msra.mxu0 %v1363
    %1383 = vmatprep.subr.bf16.mxu0 0
    %1384 = vmatpush1.bf16.msra.mxu0 %v1362
    %1385 = vmatprep.subr.bf16.mxu0 0
    %1386 = vmatpush2.bf16.msra.mxu0 0
    %1387 = vmatprep.subr.bf16.mxu0 0
    %1388 = vmatpush2.bf16.msra.mxu0 0
    %1389 = vmatprep.subr.bf16.mxu0 0
    %1390 = vmatpush2.bf16.msra.mxu0 0
    %1391 = vmatprep.subr.bf16.mxu0 0
    %1392 = vmatpush2.bf16.msra.mxu0 0
    %1393 = vmatprep.subr.bf16.mxu0 0
    %1394 = vmatpush2.bf16.msra.mxu0 0
    %1395 = vmatprep.subr.bf16.mxu0 0
    %1396 = vmatpush2.bf16.msra.mxu0 0
    %1397 = vmatprep.subr.bf16.mxu0 0
    %1398 = vmatpush2.bf16.msra.mxu0 0
    %1399 = vmatprep.subr.bf16.mxu0 0
    %1400 = vmatpush2.bf16.msra.mxu0 0
    %1401 = vmatprep.mubr.bf16.mxu0 0
    %1402 = vmatmul.mubr.bf16.gmra.mxu0 %v1367
    %v1403 = vpop.f32.mrf.mxu0
    %v1404 = vadd.f32 %v1345, %v1403
    %v1405 = vpop.f32.mrf.mxu0
    %v1406 = vpop.f32.mrf.mxu0
    %v1407 = vpop.f32.mrf.mxu0
    %1408 = vdwg.mxu0
    %vm1409 = vcmask 58368
    %1410 = vst.msk [vmem:[#allocation14] sm:$0x3] %vm1409, %v1404
    // Predicated region
    $region74: #{tpu_custom_call.1} parent=1 // pred_check
      _
    $region75: #{tpu_custom_call.1} parent=1 // pred_check_branch
      %1412 = sbr.rel (0) target = $region77
    $region76: #{tpu_custom_call.1} parent=1 // pred_region
      %s1414 = ssub.s32 32, 32
      %1415 = vsyncadd [#allocation4], %s1414
      %s1417 = sshll.u32 [#allocation14], 4
      %s1418 = int_to_ptr.vmem [resolvable:$true] %s1417
      %1420 = dma.vmem_to_hbm [thread:$0]  %s1418, 32, %s11, [#allocation4]
    $region77: #{tpu_custom_call.1} parent=1 // pred_fallthru
      _
    // Predicated region
    $region78: #{tpu_custom_call.1} parent=1 // pred_check
      _
    $region79: #{tpu_custom_call.1} parent=1 // pred_check_branch
      %1422 = sbr.rel (0) target = $region81
    $region80: #{tpu_custom_call.1} parent=1 // pred_region
      %1423 = dma.done [#allocation4], 32
    $region81: #{tpu_custom_call.1} parent=1 // pred_fallthru
      _
    %1424 = vsyncpa [#allocation3], 1
    %1425 = vsyncpa [#allocation6], 1
    %1426 = vsyncpa [#allocation9], 1
    %1427 = vsyncpa [#allocation12], 1
    %1428 = vsyncpa [#allocation4], 1

</llo_original>
